<compile_context>
chip_gen: v5e
topology: v5e:2x2
jax: 0.10.0
libtpu: 0.0.40
codegen_flags: <defaults>
</compile_context>

<pallas_src>
import functools

import jax
import jax.numpy as jnp
from jax.experimental import pallas as pl
from jax.experimental.pallas import tpu as pltpu


# ----------------------------------------------------------------------------
# Pallas kernel: tiled matmul + bias + optional ReLU (used for convs & resize)
# ----------------------------------------------------------------------------
def _matmul_bias_act_kernel(a_ref, b_ref, bias_ref, o_ref, *, relu):
    # o = act(a @ b + bias); accumulate in f32 on the MXU.
    acc = jnp.dot(a_ref[...], b_ref[...], preferred_element_type=jnp.float32)
    acc = acc + bias_ref[...]                       # (1, tn) broadcasts over rows
    if relu:
        acc = jnp.maximum(acc, 0.0)
    o_ref[...] = acc.astype(o_ref.dtype)


def _round_up(x, m):
    return (x + m - 1) // m * m


def _pad2d(a, rows, cols):
    r, c = a.shape
    if (r, c) == (rows, cols):
        return a
    return jnp.pad(a, ((0, rows - r), (0, cols - c)))


def matmul_bias_act(a, b, bias=None, *, relu=False, tm=256, tn=256):
    """act((a @ b) + bias) with M/N tiling, lane-dense (128-mult) N, padded M.

    a: (M, K)   b: (K, N)   bias: (1, N) or None.  Returns (M, N) float32.
    """
    M, K = a.shape
    K2, N = b.shape
    assert K == K2, (K, K2)

    # Tile sizes: sublane-aligned M tile, lane-dense (>=128) N tile.
    tm_e = min(tm, _round_up(M, 8))
    tn_e = min(tn, _round_up(N, 128))
    Mp = _round_up(M, tm_e)
    Np = _round_up(N, tn_e)

    ap = _pad2d(a, Mp, K)
    bp = _pad2d(b, K, Np)
    if bias is None:
        biasp = jnp.zeros((1, Np), jnp.float32)
    else:
        biasp = _pad2d(bias.reshape(1, -1).astype(jnp.float32), 1, Np)

    grid = (Mp // tm_e, Np // tn_e)
    kernel = functools.partial(_matmul_bias_act_kernel, relu=relu)

    flops = 2 * Mp * K * Np
    bytes_accessed = 4 * (Mp * K + K * Np + Np + Mp * Np)

    out = pl.pallas_call(
        kernel,
        out_shape=jax.ShapeDtypeStruct((Mp, Np), jnp.float32),
        grid=grid,
        in_specs=[
            pl.BlockSpec((tm_e, K), lambda i, j: (i, 0)),     # A tile (full K)
            pl.BlockSpec((K, tn_e), lambda i, j: (0, j)),     # B tile (full K)
            pl.BlockSpec((1, tn_e), lambda i, j: (0, j)),     # bias tile
        ],
        out_specs=pl.BlockSpec((tm_e, tn_e), lambda i, j: (i, j)),
        compiler_params=pltpu.CompilerParams(
            dimension_semantics=("parallel", "parallel"),
            vmem_limit_bytes=48 * 1024 * 1024,                # safe on v5e/v6e/v7x
        ),
        cost_estimate=pl.CostEstimate(
            flops=flops, transcendentals=0, bytes_accessed=bytes_accessed),
    )(ap, bp, biasp)

    return out[:M, :N]


# ----------------------------------------------------------------------------
# Conv2d (PyTorch semantics) on NHWC activations via the Pallas matmul
# ----------------------------------------------------------------------------
def _im2col_nhwc(x, k, stride, pad):
    """x: (N, H, W, C) -> ((N*Ho*Wo, k*k*C), Ho, Wo). Column order = (kh, kw, c)."""
    N, H, W, C = x.shape
    xp = jnp.pad(x, ((0, 0), (pad, pad), (pad, pad), (0, 0)))
    Ho = (H + 2 * pad - k) // stride + 1
    Wo = (W + 2 * pad - k) // stride + 1
    taps = []
    for dy in range(k):
        for dx in range(k):
            taps.append(
                xp[:, dy:dy + stride * (Ho - 1) + 1:stride,
                      dx:dx + stride * (Wo - 1) + 1:stride, :]
            )                                         # each (N, Ho, Wo, C)
    p = jnp.stack(taps, axis=3)                       # (N, Ho, Wo, k*k, C)
    return p.reshape(N * Ho * Wo, k * k * C), Ho, Wo


def conv2d_nhwc(x, w, b, *, stride, pad, relu):
    """NHWC conv with PyTorch weight layout (Cout, Cin, kh, kw).

    Returns NHWC output (N, Ho, Wo, Cout).
    """
    # TODO(synk): im2col is still materialized by XLA (NHWC, so no transposes);
    # a fully fused in-kernel tap-accumulating conv would need halo/Element
    # indexed blocks or manual DMA and is left out for robustness.
    N, H, W, Cin = x.shape
    Cout, Cin2, k, _ = w.shape
    assert Cin == Cin2
    cols, Ho, Wo = _im2col_nhwc(x, k, stride, pad)    # (N*Ho*Wo, k*k*Cin)
    K = k * k * Cin
    Kp = _round_up(K, 128)                            # full-depth MXU contraction
    wmat = w.transpose(2, 3, 1, 0).reshape(K, Cout)   # (kh, kw, ci, co) flatten
    if Kp != K:
        cols = jnp.pad(cols, ((0, 0), (0, Kp - K)))
        wmat = jnp.pad(wmat, ((0, Kp - K), (0, 0)))
    out = matmul_bias_act(cols, wmat, b.reshape(1, Cout), relu=relu)  # (M, Cout)
    return out.reshape(N, Ho, Wo, Cout)


# ----------------------------------------------------------------------------
# Bilinear resize (align_corners=False) as two lane-dense Pallas matmuls
# ----------------------------------------------------------------------------
def _bilinear_matrix(out_size, in_size):
    """Row-stochastic matrix reproducing F.interpolate(mode='bilinear',
    align_corners=False) along one spatial axis."""
    o = jnp.arange(out_size, dtype=jnp.float32)
    src = (o + 0.5) * (in_size / out_size) - 0.5
    src = jnp.maximum(src, 0.0)                       # PyTorch clamps negatives to 0
    i0 = jnp.floor(src).astype(jnp.int32)
    i0 = jnp.minimum(i0, in_size - 1)
    i1 = jnp.minimum(i0 + 1, in_size - 1)
    w1 = src - i0.astype(jnp.float32)
    w0 = 1.0 - w1
    m = (jax.nn.one_hot(i0, in_size, dtype=jnp.float32) * w0[:, None]
         + jax.nn.one_hot(i1, in_size, dtype=jnp.float32) * w1[:, None])
    return m                                          # (out_size, in_size)


def bilinear_resize_to_nchw(x_nhwc, out_h, out_w):
    """x: (N, Hin, Win, C) NHWC -> (N, C, out_h, out_w) NCHW, bilinear."""
    N, Hin, Win, C = x_nhwc.shape
    wh = _bilinear_matrix(out_h, Hin)                 # (out_h, Hin)
    ww = _bilinear_matrix(out_w, Win)                 # (out_w, Win), pre-transposed use

    # H pass: Wh @ X1, X1 lane-dense (Hin, N*Win*C)
    x1 = x_nhwc.transpose(1, 0, 2, 3).reshape(Hin, N * Win * C)
    t1 = matmul_bias_act(wh, x1)                      # (out_h, N*Win*C)

    # W pass: Ww @ X2, X2 lane-dense (Win, out_h*N*C)
    x2 = t1.reshape(out_h, N, Win, C).transpose(2, 0, 1, 3).reshape(Win, out_h * N * C)
    t2 = matmul_bias_act(ww, x2)                      # (out_w, out_h*N*C)

    return t2.reshape(out_w, out_h, N, C).transpose(2, 3, 1, 0)  # NCHW


# ----------------------------------------------------------------------------
# Model: _SimpleSegmentationModel forward
# ----------------------------------------------------------------------------
def init_params(key, in_ch=4, hidden=32, head_ch=16, num_classes=6):
    ks = jax.random.split(key, 8)

    def conv_init(k, cout, cin, ksz):
        fan_in = cin * ksz * ksz
        w = jax.random.normal(k, (cout, cin, ksz, ksz), jnp.float32) / jnp.sqrt(fan_in)
        b = jnp.zeros((cout,), jnp.float32)
        return w, b

    p = {}
    p["b1_w"], p["b1_b"] = conv_init(ks[0], hidden, in_ch, 3)        # backbone stage 1
    p["b2_w"], p["b2_b"] = conv_init(ks[1], hidden, hidden, 3)       # backbone stage 2
    p["cls_w1"], p["cls_b1"] = conv_init(ks[2], head_ch, hidden, 3)  # classifier head
    p["cls_w2"], p["cls_b2"] = conv_init(ks[3], num_classes, head_ch, 1)
    p["aux_w1"], p["aux_b1"] = conv_init(ks[4], head_ch, hidden, 3)  # aux classifier head
    p["aux_w2"], p["aux_b2"] = conv_init(ks[5], num_classes, head_ch, 1)
    return p


def segmentation_forward(params, x):
    """Mirrors _SimpleSegmentationModel.forward.

    x is NCHW (PyTorch layout); internally the conv pipeline runs NHWC and the
    bilinear upsample emits NCHW directly (no intermediate layout churn).
    """
    input_size = x.shape[-2:]                         # (H, W)
    xh = jnp.transpose(x, (0, 2, 3, 1))               # one NCHW -> NHWC transpose

    # backbone(x) -> features with 'aux' (shallower) and 'out' (deeper)
    f_aux = conv2d_nhwc(xh, params["b1_w"], params["b1_b"], stride=2, pad=1, relu=True)
    f_out = conv2d_nhwc(f_aux, params["b2_w"], params["b2_b"], stride=2, pad=1, relu=True)
    features = {"out": f_out, "aux": f_aux}

    result = {}

    # classifier + bilinear upsample back to input size
    y = features["out"]
    y = conv2d_nhwc(y, params["cls_w1"], params["cls_b1"], stride=1, pad=1, relu=True)
    y = conv2d_nhwc(y, params["cls_w2"], params["cls_b2"], stride=1, pad=0, relu=False)
    result["out"] = bilinear_resize_to_nchw(y, input_size[0], input_size[1])

    # aux_classifier branch
    z = features["aux"]
    z = conv2d_nhwc(z, params["aux_w1"], params["aux_b1"], stride=1, pad=1, relu=True)
    z = conv2d_nhwc(z, params["aux_w2"], params["aux_b2"], stride=1, pad=0, relu=False)
    result["aux"] = bilinear_resize_to_nchw(z, input_size[0], input_size[1])

    return result


if __name__ == "__main__":
    key = jax.random.PRNGKey(0)
    k_param, k_x = jax.random.split(key)

    params = init_params(k_param)
    x = jax.random.normal(k_x, (2, 4, 16, 16), jnp.float32)   # NCHW

    fwd = jax.jit(segmentation_forward)
    result = fwd(params, x)
    jax.block_until_ready(result)

    assert result["out"].shape == (2, 6, 16, 16), result["out"].shape
    assert result["aux"].shape == (2, 6, 16, 16), result["aux"].shape
    assert jnp.all(jnp.isfinite(result["out"])) and jnp.all(jnp.isfinite(result["aux"]))

    print("KERNEL_OK")
</pallas_src>

<mosaic_0001>
module attributes {stable_mosaic.version = 11 : i64} {
  func.func @_matmul_bias_act_kernel(%arg0: i32, %arg1: i32, %arg2: memref<128x128xf32, #tpu.memory_space<vmem>>, %arg3: memref<128x128xf32, #tpu.memory_space<vmem>>, %arg4: memref<1x128xf32, #tpu.memory_space<vmem>>, %arg5: memref<128x128xf32, #tpu.memory_space<vmem>>) attributes {dimension_semantics = [#tpu.dimension_semantics<parallel>, #tpu.dimension_semantics<parallel>], iteration_bounds = array<i64: 1, 1>, scalar_prefetch = 0 : i64, scratch_operands = 0 : i64, tpu.core_type = #tpu.core_type<tc>, window_params = [{transform_indices = @transform_0, window_bounds = array<i64: 128, 128>}, {transform_indices = @transform_1, window_bounds = array<i64: 128, 128>}, {transform_indices = @transform_2, window_bounds = array<i64: 1, 128>}, {transform_indices = @transform_3, window_bounds = array<i64: 128, 128>}]} {
    %c0 = arith.constant 0 : index
    %c0_0 = arith.constant 0 : index
    %0 = vector.load %arg2[%c0, %c0_0] : memref<128x128xf32, #tpu.memory_space<vmem>>, vector<128x128xf32>
    %c0_1 = arith.constant 0 : index
    %c0_2 = arith.constant 0 : index
    %1 = vector.load %arg3[%c0_1, %c0_2] : memref<128x128xf32, #tpu.memory_space<vmem>>, vector<128x128xf32>
    %cst = arith.constant dense<0.000000e+00> : vector<128x128xf32>
    %2 = tpu.matmul %0, %1, %cst {dimension_numbers = #tpu.dot_dimension_numbers<[1], [0], [0], [1], [0, 0, 1, 1], [], []>} : vector<128x128xf32>, vector<128x128xf32>, vector<128x128xf32> -> vector<128x128xf32>
    %c0_3 = arith.constant 0 : index
    %c0_4 = arith.constant 0 : index
    %3 = vector.load %arg4[%c0_3, %c0_4] : memref<1x128xf32, #tpu.memory_space<vmem>>, vector<1x128xf32>
    %4 = vector.broadcast %3 : vector<1x128xf32> to vector<128x128xf32>
    %5 = arith.addf %2, %4 : vector<128x128xf32>
    %cst_5 = arith.constant 0.000000e+00 : f32
    %6 = vector.broadcast %cst_5 : f32 to vector<128x128xf32>
    %7 = arith.maximumf %5, %6 : vector<128x128xf32>
    %c0_6 = arith.constant 0 : index
    %c0_7 = arith.constant 0 : index
    %8 = vector.load %arg5[%c0_6, %c0_7] : memref<128x128xf32, #tpu.memory_space<vmem>>, vector<128x128xf32>
    tpu.vector_store %arg5[%c0_6, %c0_7], %7 {strides = array<i32>} : memref<128x128xf32, #tpu.memory_space<vmem>>, vector<128x128xf32>,
    return
  }
  func.func @transform_0(%arg0: i32, %arg1: i32) -> (i32, i32) {
    %c0_i32 = arith.constant 0 : i32
    %c0_i32_0 = arith.constant 0 : i32
    return %arg0, %c0_i32 : i32, i32
  }
  func.func @transform_1(%arg0: i32, %arg1: i32) -> (i32, i32) {
    %c0_i32 = arith.constant 0 : i32
    %c0_i32_0 = arith.constant 0 : i32
    return %c0_i32, %arg1 : i32, i32
  }
  func.func @transform_2(%arg0: i32, %arg1: i32) -> (i32, i32) {
    %c0_i32 = arith.constant 0 : i32
    %c0_i32_0 = arith.constant 0 : i32
    return %c0_i32, %arg1 : i32, i32
  }
  func.func @transform_3(%arg0: i32, %arg1: i32) -> (i32, i32) {
    %c0_i32 = arith.constant 0 : i32
    return %arg0, %arg1 : i32, i32
  }
}

module attributes {stable_mosaic.version = 11 : i64} {
  func.func @_matmul_bias_act_kernel(%arg0: i32, %arg1: i32, %arg2: memref<128x384xf32, #tpu.memory_space<vmem>>, %arg3: memref<384x128xf32, #tpu.memory_space<vmem>>, %arg4: memref<1x128xf32, #tpu.memory_space<vmem>>, %arg5: memref<128x128xf32, #tpu.memory_space<vmem>>) attributes {dimension_semantics = [#tpu.dimension_semantics<parallel>, #tpu.dimension_semantics<parallel>], iteration_bounds = array<i64: 1, 1>, scalar_prefetch = 0 : i64, scratch_operands = 0 : i64, tpu.core_type = #tpu.core_type<tc>, window_params = [{transform_indices = @transform_0, window_bounds = array<i64: 128, 384>}, {transform_indices = @transform_1, window_bounds = array<i64: 384, 128>}, {transform_indices = @transform_2, window_bounds = array<i64: 1, 128>}, {transform_indices = @transform_3, window_bounds = array<i64: 128, 128>}]} {
    %c0 = arith.constant 0 : index
    %c0_0 = arith.constant 0 : index
    %0 = vector.load %arg2[%c0, %c0_0] : memref<128x384xf32, #tpu.memory_space<vmem>>, vector<128x384xf32>
    %c0_1 = arith.constant 0 : index
    %c0_2 = arith.constant 0 : index
    %1 = vector.load %arg3[%c0_1, %c0_2] : memref<384x128xf32, #tpu.memory_space<vmem>>, vector<384x128xf32>
    %cst = arith.constant dense<0.000000e+00> : vector<128x128xf32>
    %2 = tpu.matmul %0, %1, %cst {dimension_numbers = #tpu.dot_dimension_numbers<[1], [0], [0], [1], [0, 0, 1, 1], [], []>} : vector<128x384xf32>, vector<384x128xf32>, vector<128x128xf32> -> vector<128x128xf32>
    %c0_3 = arith.constant 0 : index
    %c0_4 = arith.constant 0 : index
    %3 = vector.load %arg4[%c0_3, %c0_4] : memref<1x128xf32, #tpu.memory_space<vmem>>, vector<1x128xf32>
    %4 = vector.broadcast %3 : vector<1x128xf32> to vector<128x128xf32>
    %5 = arith.addf %2, %4 : vector<128x128xf32>
    %cst_5 = arith.constant 0.000000e+00 : f32
    %6 = vector.broadcast %cst_5 : f32 to vector<128x128xf32>
    %7 = arith.maximumf %5, %6 : vector<128x128xf32>
    %c0_6 = arith.constant 0 : index
    %c0_7 = arith.constant 0 : index
    %8 = vector.load %arg5[%c0_6, %c0_7] : memref<128x128xf32, #tpu.memory_space<vmem>>, vector<128x128xf32>
    tpu.vector_store %arg5[%c0_6, %c0_7], %7 {strides = array<i32>} : memref<128x128xf32, #tpu.memory_space<vmem>>, vector<128x128xf32>,
    return
  }
  func.func @transform_0(%arg0: i32, %arg1: i32) -> (i32, i32) {
    %c0_i32 = arith.constant 0 : i32
    %c0_i32_0 = arith.constant 0 : i32
    return %arg0, %c0_i32 : i32, i32
  }
  func.func @transform_1(%arg0: i32, %arg1: i32) -> (i32, i32) {
    %c0_i32 = arith.constant 0 : i32
    %c0_i32_0 = arith.constant 0 : i32
    return %c0_i32, %arg1 : i32, i32
  }
  func.func @transform_2(%arg0: i32, %arg1: i32) -> (i32, i32) {
    %c0_i32 = arith.constant 0 : i32
    %c0_i32_0 = arith.constant 0 : i32
    return %c0_i32, %arg1 : i32, i32
  }
  func.func @transform_3(%arg0: i32, %arg1: i32) -> (i32, i32) {
    %c0_i32 = arith.constant 0 : i32
    return %arg0, %arg1 : i32, i32
  }
}

module attributes {stable_mosaic.version = 11 : i64} {
  func.func @_matmul_bias_act_kernel(%arg0: i32, %arg1: i32, %arg2: memref<128x128xf32, #tpu.memory_space<vmem>>, %arg3: memref<128x128xf32, #tpu.memory_space<vmem>>, %arg4: memref<1x128xf32, #tpu.memory_space<vmem>>, %arg5: memref<128x128xf32, #tpu.memory_space<vmem>>) attributes {dimension_semantics = [#tpu.dimension_semantics<parallel>, #tpu.dimension_semantics<parallel>], iteration_bounds = array<i64: 1, 1>, scalar_prefetch = 0 : i64, scratch_operands = 0 : i64, tpu.core_type = #tpu.core_type<tc>, window_params = [{transform_indices = @transform_0, window_bounds = array<i64: 128, 128>}, {transform_indices = @transform_1, window_bounds = array<i64: 128, 128>}, {transform_indices = @transform_2, window_bounds = array<i64: 1, 128>}, {transform_indices = @transform_3, window_bounds = array<i64: 128, 128>}]} {
    %c0 = arith.constant 0 : index
    %c0_0 = arith.constant 0 : index
    %0 = vector.load %arg2[%c0, %c0_0] : memref<128x128xf32, #tpu.memory_space<vmem>>, vector<128x128xf32>
    %c0_1 = arith.constant 0 : index
    %c0_2 = arith.constant 0 : index
    %1 = vector.load %arg3[%c0_1, %c0_2] : memref<128x128xf32, #tpu.memory_space<vmem>>, vector<128x128xf32>
    %cst = arith.constant dense<0.000000e+00> : vector<128x128xf32>
    %2 = tpu.matmul %0, %1, %cst {dimension_numbers = #tpu.dot_dimension_numbers<[1], [0], [0], [1], [0, 0, 1, 1], [], []>} : vector<128x128xf32>, vector<128x128xf32>, vector<128x128xf32> -> vector<128x128xf32>
    %c0_3 = arith.constant 0 : index
    %c0_4 = arith.constant 0 : index
    %3 = vector.load %arg4[%c0_3, %c0_4] : memref<1x128xf32, #tpu.memory_space<vmem>>, vector<1x128xf32>
    %4 = vector.broadcast %3 : vector<1x128xf32> to vector<128x128xf32>
    %5 = arith.addf %2, %4 : vector<128x128xf32>
    %c0_5 = arith.constant 0 : index
    %c0_6 = arith.constant 0 : index
    %6 = vector.load %arg5[%c0_5, %c0_6] : memref<128x128xf32, #tpu.memory_space<vmem>>, vector<128x128xf32>
    tpu.vector_store %arg5[%c0_5, %c0_6], %5 {strides = array<i32>} : memref<128x128xf32, #tpu.memory_space<vmem>>, vector<128x128xf32>,
    return
  }
  func.func @transform_0(%arg0: i32, %arg1: i32) -> (i32, i32) {
    %c0_i32 = arith.constant 0 : i32
    %c0_i32_0 = arith.constant 0 : i32
    return %arg0, %c0_i32 : i32, i32
  }
  func.func @transform_1(%arg0: i32, %arg1: i32) -> (i32, i32) {
    %c0_i32 = arith.constant 0 : i32
    %c0_i32_0 = arith.constant 0 : i32
    return %c0_i32, %arg1 : i32, i32
  }
  func.func @transform_2(%arg0: i32, %arg1: i32) -> (i32, i32) {
    %c0_i32 = arith.constant 0 : i32
    %c0_i32_0 = arith.constant 0 : i32
    return %c0_i32, %arg1 : i32, i32
  }
  func.func @transform_3(%arg0: i32, %arg1: i32) -> (i32, i32) {
    %c0_i32 = arith.constant 0 : i32
    return %arg0, %arg1 : i32, i32
  }
}

module attributes {stable_mosaic.version = 11 : i64} {
  func.func @_matmul_bias_act_kernel(%arg0: i32, %arg1: i32, %arg2: memref<16x8xf32, #tpu.memory_space<vmem>>, %arg3: memref<8x128xf32, #tpu.memory_space<vmem>>, %arg4: memref<1x128xf32, #tpu.memory_space<vmem>>, %arg5: memref<16x128xf32, #tpu.memory_space<vmem>>) attributes {dimension_semantics = [#tpu.dimension_semantics<parallel>, #tpu.dimension_semantics<parallel>], iteration_bounds = array<i64: 1, 1>, scalar_prefetch = 0 : i64, scratch_operands = 0 : i64, tpu.core_type = #tpu.core_type<tc>, window_params = [{transform_indices = @transform_0, window_bounds = array<i64: 16, 8>}, {transform_indices = @transform_1, window_bounds = array<i64: 8, 128>}, {transform_indices = @transform_2, window_bounds = array<i64: 1, 128>}, {transform_indices = @transform_3, window_bounds = array<i64: 16, 128>}]} {
    %c0 = arith.constant 0 : index
    %c0_0 = arith.constant 0 : index
    %0 = vector.load %arg2[%c0, %c0_0] : memref<16x8xf32, #tpu.memory_space<vmem>>, vector<16x8xf32>
    %c0_1 = arith.constant 0 : index
    %c0_2 = arith.constant 0 : index
    %1 = vector.load %arg3[%c0_1, %c0_2] : memref<8x128xf32, #tpu.memory_space<vmem>>, vector<8x128xf32>
    %cst = arith.constant dense<0.000000e+00> : vector<16x128xf32>
    %2 = tpu.matmul %0, %1, %cst {dimension_numbers = #tpu.dot_dimension_numbers<[1], [0], [0], [1], [0, 0, 1, 1], [], []>} : vector<16x8xf32>, vector<8x128xf32>, vector<16x128xf32> -> vector<16x128xf32>
    %c0_3 = arith.constant 0 : index
    %c0_4 = arith.constant 0 : index
    %3 = vector.load %arg4[%c0_3, %c0_4] : memref<1x128xf32, #tpu.memory_space<vmem>>, vector<1x128xf32>
    %4 = vector.broadcast %3 : vector<1x128xf32> to vector<16x128xf32>
    %5 = arith.addf %2, %4 : vector<16x128xf32>
    %c0_5 = arith.constant 0 : index
    %c0_6 = arith.constant 0 : index
    %6 = vector.load %arg5[%c0_5, %c0_6] : memref<16x128xf32, #tpu.memory_space<vmem>>, vector<16x128xf32>
    tpu.vector_store %arg5[%c0_5, %c0_6], %5 {strides = array<i32>} : memref<16x128xf32, #tpu.memory_space<vmem>>, vector<16x128xf32>,
    return
  }
  func.func @transform_0(%arg0: i32, %arg1: i32) -> (i32, i32) {
    %c0_i32 = arith.constant 0 : i32
    %c0_i32_0 = arith.constant 0 : i32
    return %arg0, %c0_i32 : i32, i32
  }
  func.func @transform_1(%arg0: i32, %arg1: i32) -> (i32, i32) {
    %c0_i32 = arith.constant 0 : i32
    %c0_i32_0 = arith.constant 0 : i32
    return %c0_i32, %arg1 : i32, i32
  }
  func.func @transform_2(%arg0: i32, %arg1: i32) -> (i32, i32) {
    %c0_i32 = arith.constant 0 : i32
    %c0_i32_0 = arith.constant 0 : i32
    return %c0_i32, %arg1 : i32, i32
  }
  func.func @transform_3(%arg0: i32, %arg1: i32) -> (i32, i32) {
    %c0_i32 = arith.constant 0 : i32
    return %arg0, %arg1 : i32, i32
  }
}

module attributes {stable_mosaic.version = 11 : i64} {
  func.func @_matmul_bias_act_kernel(%arg0: i32, %arg1: i32, %arg2: memref<16x8xf32, #tpu.memory_space<vmem>>, %arg3: memref<8x256xf32, #tpu.memory_space<vmem>>, %arg4: memref<1x256xf32, #tpu.memory_space<vmem>>, %arg5: memref<16x256xf32, #tpu.memory_space<vmem>>) attributes {dimension_semantics = [#tpu.dimension_semantics<parallel>, #tpu.dimension_semantics<parallel>], iteration_bounds = array<i64: 1, 1>, scalar_prefetch = 0 : i64, scratch_operands = 0 : i64, tpu.core_type = #tpu.core_type<tc>, window_params = [{transform_indices = @transform_0, window_bounds = array<i64: 16, 8>}, {transform_indices = @transform_1, window_bounds = array<i64: 8, 256>}, {transform_indices = @transform_2, window_bounds = array<i64: 1, 256>}, {transform_indices = @transform_3, window_bounds = array<i64: 16, 256>}]} {
    %c0 = arith.constant 0 : index
    %c0_0 = arith.constant 0 : index
    %0 = vector.load %arg2[%c0, %c0_0] : memref<16x8xf32, #tpu.memory_space<vmem>>, vector<16x8xf32>
    %c0_1 = arith.constant 0 : index
    %c0_2 = arith.constant 0 : index
    %1 = vector.load %arg3[%c0_1, %c0_2] : memref<8x256xf32, #tpu.memory_space<vmem>>, vector<8x256xf32>
    %cst = arith.constant dense<0.000000e+00> : vector<16x256xf32>
    %2 = tpu.matmul %0, %1, %cst {dimension_numbers = #tpu.dot_dimension_numbers<[1], [0], [0], [1], [0, 0, 1, 1], [], []>} : vector<16x8xf32>, vector<8x256xf32>, vector<16x256xf32> -> vector<16x256xf32>
    %c0_3 = arith.constant 0 : index
    %c0_4 = arith.constant 0 : index
    %3 = vector.load %arg4[%c0_3, %c0_4] : memref<1x256xf32, #tpu.memory_space<vmem>>, vector<1x256xf32>
    %4 = vector.broadcast %3 : vector<1x256xf32> to vector<16x256xf32>
    %5 = arith.addf %2, %4 : vector<16x256xf32>
    %c0_5 = arith.constant 0 : index
    %c0_6 = arith.constant 0 : index
    %6 = vector.load %arg5[%c0_5, %c0_6] : memref<16x256xf32, #tpu.memory_space<vmem>>, vector<16x256xf32>
    tpu.vector_store %arg5[%c0_5, %c0_6], %5 {strides = array<i32>} : memref<16x256xf32, #tpu.memory_space<vmem>>, vector<16x256xf32>,
    return
  }
  func.func @transform_0(%arg0: i32, %arg1: i32) -> (i32, i32) {
    %c0_i32 = arith.constant 0 : i32
    %c0_i32_0 = arith.constant 0 : i32
    return %arg0, %c0_i32 : i32, i32
  }
  func.func @transform_1(%arg0: i32, %arg1: i32) -> (i32, i32) {
    %c0_i32 = arith.constant 0 : i32
    %c0_i32_0 = arith.constant 0 : i32
    return %c0_i32, %arg1 : i32, i32
  }
  func.func @transform_2(%arg0: i32, %arg1: i32) -> (i32, i32) {
    %c0_i32 = arith.constant 0 : i32
    %c0_i32_0 = arith.constant 0 : i32
    return %c0_i32, %arg1 : i32, i32
  }
  func.func @transform_3(%arg0: i32, %arg1: i32) -> (i32, i32) {
    %c0_i32 = arith.constant 0 : i32
    return %arg0, %arg1 : i32, i32
  }
}

module attributes {stable_mosaic.version = 11 : i64} {
  func.func @_matmul_bias_act_kernel(%arg0: i32, %arg1: i32, %arg2: memref<32x384xf32, #tpu.memory_space<vmem>>, %arg3: memref<384x128xf32, #tpu.memory_space<vmem>>, %arg4: memref<1x128xf32, #tpu.memory_space<vmem>>, %arg5: memref<32x128xf32, #tpu.memory_space<vmem>>) attributes {dimension_semantics = [#tpu.dimension_semantics<parallel>, #tpu.dimension_semantics<parallel>], iteration_bounds = array<i64: 1, 1>, scalar_prefetch = 0 : i64, scratch_operands = 0 : i64, tpu.core_type = #tpu.core_type<tc>, window_params = [{transform_indices = @transform_0, window_bounds = array<i64: 32, 384>}, {transform_indices = @transform_1, window_bounds = array<i64: 384, 128>}, {transform_indices = @transform_2, window_bounds = array<i64: 1, 128>}, {transform_indices = @transform_3, window_bounds = array<i64: 32, 128>}]} {
    %c0 = arith.constant 0 : index
    %c0_0 = arith.constant 0 : index
    %0 = vector.load %arg2[%c0, %c0_0] : memref<32x384xf32, #tpu.memory_space<vmem>>, vector<32x384xf32>
    %c0_1 = arith.constant 0 : index
    %c0_2 = arith.constant 0 : index
    %1 = vector.load %arg3[%c0_1, %c0_2] : memref<384x128xf32, #tpu.memory_space<vmem>>, vector<384x128xf32>
    %cst = arith.constant dense<0.000000e+00> : vector<32x128xf32>
    %2 = tpu.matmul %0, %1, %cst {dimension_numbers = #tpu.dot_dimension_numbers<[1], [0], [0], [1], [0, 0, 1, 1], [], []>} : vector<32x384xf32>, vector<384x128xf32>, vector<32x128xf32> -> vector<32x128xf32>
    %c0_3 = arith.constant 0 : index
    %c0_4 = arith.constant 0 : index
    %3 = vector.load %arg4[%c0_3, %c0_4] : memref<1x128xf32, #tpu.memory_space<vmem>>, vector<1x128xf32>
    %4 = vector.broadcast %3 : vector<1x128xf32> to vector<32x128xf32>
    %5 = arith.addf %2, %4 : vector<32x128xf32>
    %cst_5 = arith.constant 0.000000e+00 : f32
    %6 = vector.broadcast %cst_5 : f32 to vector<32x128xf32>
    %7 = arith.maximumf %5, %6 : vector<32x128xf32>
    %c0_6 = arith.constant 0 : index
    %c0_7 = arith.constant 0 : index
    %8 = vector.load %arg5[%c0_6, %c0_7] : memref<32x128xf32, #tpu.memory_space<vmem>>, vector<32x128xf32>
    tpu.vector_store %arg5[%c0_6, %c0_7], %7 {strides = array<i32>} : memref<32x128xf32, #tpu.memory_space<vmem>>, vector<32x128xf32>,
    return
  }
  func.func @transform_0(%arg0: i32, %arg1: i32) -> (i32, i32) {
    %c0_i32 = arith.constant 0 : i32
    %c0_i32_0 = arith.constant 0 : i32
    return %arg0, %c0_i32 : i32, i32
  }
  func.func @transform_1(%arg0: i32, %arg1: i32) -> (i32, i32) {
    %c0_i32 = arith.constant 0 : i32
    %c0_i32_0 = arith.constant 0 : i32
    return %c0_i32, %arg1 : i32, i32
  }
  func.func @transform_2(%arg0: i32, %arg1: i32) -> (i32, i32) {
    %c0_i32 = arith.constant 0 : i32
    %c0_i32_0 = arith.constant 0 : i32
    return %c0_i32, %arg1 : i32, i32
  }
  func.func @transform_3(%arg0: i32, %arg1: i32) -> (i32, i32) {
    %c0_i32 = arith.constant 0 : i32
    return %arg0, %arg1 : i32, i32
  }
}

module attributes {stable_mosaic.version = 11 : i64} {
  func.func @_matmul_bias_act_kernel(%arg0: i32, %arg1: i32, %arg2: memref<32x128xf32, #tpu.memory_space<vmem>>, %arg3: memref<128x128xf32, #tpu.memory_space<vmem>>, %arg4: memref<1x128xf32, #tpu.memory_space<vmem>>, %arg5: memref<32x128xf32, #tpu.memory_space<vmem>>) attributes {dimension_semantics = [#tpu.dimension_semantics<parallel>, #tpu.dimension_semantics<parallel>], iteration_bounds = array<i64: 1, 1>, scalar_prefetch = 0 : i64, scratch_operands = 0 : i64, tpu.core_type = #tpu.core_type<tc>, window_params = [{transform_indices = @transform_0, window_bounds = array<i64: 32, 128>}, {transform_indices = @transform_1, window_bounds = array<i64: 128, 128>}, {transform_indices = @transform_2, window_bounds = array<i64: 1, 128>}, {transform_indices = @transform_3, window_bounds = array<i64: 32, 128>}]} {
    %c0 = arith.constant 0 : index
    %c0_0 = arith.constant 0 : index
    %0 = vector.load %arg2[%c0, %c0_0] : memref<32x128xf32, #tpu.memory_space<vmem>>, vector<32x128xf32>
    %c0_1 = arith.constant 0 : index
    %c0_2 = arith.constant 0 : index
    %1 = vector.load %arg3[%c0_1, %c0_2] : memref<128x128xf32, #tpu.memory_space<vmem>>, vector<128x128xf32>
    %cst = arith.constant dense<0.000000e+00> : vector<32x128xf32>
    %2 = tpu.matmul %0, %1, %cst {dimension_numbers = #tpu.dot_dimension_numbers<[1], [0], [0], [1], [0, 0, 1, 1], [], []>} : vector<32x128xf32>, vector<128x128xf32>, vector<32x128xf32> -> vector<32x128xf32>
    %c0_3 = arith.constant 0 : index
    %c0_4 = arith.constant 0 : index
    %3 = vector.load %arg4[%c0_3, %c0_4] : memref<1x128xf32, #tpu.memory_space<vmem>>, vector<1x128xf32>
    %4 = vector.broadcast %3 : vector<1x128xf32> to vector<32x128xf32>
    %5 = arith.addf %2, %4 : vector<32x128xf32>
    %c0_5 = arith.constant 0 : index
    %c0_6 = arith.constant 0 : index
    %6 = vector.load %arg5[%c0_5, %c0_6] : memref<32x128xf32, #tpu.memory_space<vmem>>, vector<32x128xf32>
    tpu.vector_store %arg5[%c0_5, %c0_6], %5 {strides = array<i32>} : memref<32x128xf32, #tpu.memory_space<vmem>>, vector<32x128xf32>,
    return
  }
  func.func @transform_0(%arg0: i32, %arg1: i32) -> (i32, i32) {
    %c0_i32 = arith.constant 0 : i32
    %c0_i32_0 = arith.constant 0 : i32
    return %arg0, %c0_i32 : i32, i32
  }
  func.func @transform_1(%arg0: i32, %arg1: i32) -> (i32, i32) {
    %c0_i32 = arith.constant 0 : i32
    %c0_i32_0 = arith.constant 0 : i32
    return %c0_i32, %arg1 : i32, i32
  }
  func.func @transform_2(%arg0: i32, %arg1: i32) -> (i32, i32) {
    %c0_i32 = arith.constant 0 : i32
    %c0_i32_0 = arith.constant 0 : i32
    return %c0_i32, %arg1 : i32, i32
  }
  func.func @transform_3(%arg0: i32, %arg1: i32) -> (i32, i32) {
    %c0_i32 = arith.constant 0 : i32
    return %arg0, %arg1 : i32, i32
  }
}

module attributes {stable_mosaic.version = 11 : i64} {
  func.func @_matmul_bias_act_kernel(%arg0: i32, %arg1: i32, %arg2: memref<16x4xf32, #tpu.memory_space<vmem>>, %arg3: memref<4x128xf32, #tpu.memory_space<vmem>>, %arg4: memref<1x128xf32, #tpu.memory_space<vmem>>, %arg5: memref<16x128xf32, #tpu.memory_space<vmem>>) attributes {dimension_semantics = [#tpu.dimension_semantics<parallel>, #tpu.dimension_semantics<parallel>], iteration_bounds = array<i64: 1, 1>, scalar_prefetch = 0 : i64, scratch_operands = 0 : i64, tpu.core_type = #tpu.core_type<tc>, window_params = [{transform_indices = @transform_0, window_bounds = array<i64: 16, 4>}, {transform_indices = @transform_1, window_bounds = array<i64: 4, 128>}, {transform_indices = @transform_2, window_bounds = array<i64: 1, 128>}, {transform_indices = @transform_3, window_bounds = array<i64: 16, 128>}]} {
    %c0 = arith.constant 0 : index
    %c0_0 = arith.constant 0 : index
    %0 = vector.load %arg2[%c0, %c0_0] : memref<16x4xf32, #tpu.memory_space<vmem>>, vector<16x4xf32>
    %c0_1 = arith.constant 0 : index
    %c0_2 = arith.constant 0 : index
    %1 = vector.load %arg3[%c0_1, %c0_2] : memref<4x128xf32, #tpu.memory_space<vmem>>, vector<4x128xf32>
    %cst = arith.constant dense<0.000000e+00> : vector<16x128xf32>
    %2 = tpu.matmul %0, %1, %cst {dimension_numbers = #tpu.dot_dimension_numbers<[1], [0], [0], [1], [0, 0, 1, 1], [], []>} : vector<16x4xf32>, vector<4x128xf32>, vector<16x128xf32> -> vector<16x128xf32>
    %c0_3 = arith.constant 0 : index
    %c0_4 = arith.constant 0 : index
    %3 = vector.load %arg4[%c0_3, %c0_4] : memref<1x128xf32, #tpu.memory_space<vmem>>, vector<1x128xf32>
    %4 = vector.broadcast %3 : vector<1x128xf32> to vector<16x128xf32>
    %5 = arith.addf %2, %4 : vector<16x128xf32>
    %c0_5 = arith.constant 0 : index
    %c0_6 = arith.constant 0 : index
    %6 = vector.load %arg5[%c0_5, %c0_6] : memref<16x128xf32, #tpu.memory_space<vmem>>, vector<16x128xf32>
    tpu.vector_store %arg5[%c0_5, %c0_6], %5 {strides = array<i32>} : memref<16x128xf32, #tpu.memory_space<vmem>>, vector<16x128xf32>,
    return
  }
  func.func @transform_0(%arg0: i32, %arg1: i32) -> (i32, i32) {
    %c0_i32 = arith.constant 0 : i32
    %c0_i32_0 = arith.constant 0 : i32
    return %arg0, %c0_i32 : i32, i32
  }
  func.func @transform_1(%arg0: i32, %arg1: i32) -> (i32, i32) {
    %c0_i32 = arith.constant 0 : i32
    %c0_i32_0 = arith.constant 0 : i32
    return %c0_i32, %arg1 : i32, i32
  }
  func.func @transform_2(%arg0: i32, %arg1: i32) -> (i32, i32) {
    %c0_i32 = arith.constant 0 : i32
    %c0_i32_0 = arith.constant 0 : i32
    return %c0_i32, %arg1 : i32, i32
  }
  func.func @transform_3(%arg0: i32, %arg1: i32) -> (i32, i32) {
    %c0_i32 = arith.constant 0 : i32
    return %arg0, %arg1 : i32, i32
  }
}

module attributes {stable_mosaic.version = 11 : i64} {
  func.func @_matmul_bias_act_kernel(%arg0: i32, %arg1: i32, %arg2: memref<16x4xf32, #tpu.memory_space<vmem>>, %arg3: memref<4x256xf32, #tpu.memory_space<vmem>>, %arg4: memref<1x256xf32, #tpu.memory_space<vmem>>, %arg5: memref<16x256xf32, #tpu.memory_space<vmem>>) attributes {dimension_semantics = [#tpu.dimension_semantics<parallel>, #tpu.dimension_semantics<parallel>], iteration_bounds = array<i64: 1, 1>, scalar_prefetch = 0 : i64, scratch_operands = 0 : i64, tpu.core_type = #tpu.core_type<tc>, window_params = [{transform_indices = @transform_0, window_bounds = array<i64: 16, 4>}, {transform_indices = @transform_1, window_bounds = array<i64: 4, 256>}, {transform_indices = @transform_2, window_bounds = array<i64: 1, 256>}, {transform_indices = @transform_3, window_bounds = array<i64: 16, 256>}]} {
    %c0 = arith.constant 0 : index
    %c0_0 = arith.constant 0 : index
    %0 = vector.load %arg2[%c0, %c0_0] : memref<16x4xf32, #tpu.memory_space<vmem>>, vector<16x4xf32>
    %c0_1 = arith.constant 0 : index
    %c0_2 = arith.constant 0 : index
    %1 = vector.load %arg3[%c0_1, %c0_2] : memref<4x256xf32, #tpu.memory_space<vmem>>, vector<4x256xf32>
    %cst = arith.constant dense<0.000000e+00> : vector<16x256xf32>
    %2 = tpu.matmul %0, %1, %cst {dimension_numbers = #tpu.dot_dimension_numbers<[1], [0], [0], [1], [0, 0, 1, 1], [], []>} : vector<16x4xf32>, vector<4x256xf32>, vector<16x256xf32> -> vector<16x256xf32>
    %c0_3 = arith.constant 0 : index
    %c0_4 = arith.constant 0 : index
    %3 = vector.load %arg4[%c0_3, %c0_4] : memref<1x256xf32, #tpu.memory_space<vmem>>, vector<1x256xf32>
    %4 = vector.broadcast %3 : vector<1x256xf32> to vector<16x256xf32>
    %5 = arith.addf %2, %4 : vector<16x256xf32>
    %c0_5 = arith.constant 0 : index
    %c0_6 = arith.constant 0 : index
    %6 = vector.load %arg5[%c0_5, %c0_6] : memref<16x256xf32, #tpu.memory_space<vmem>>, vector<16x256xf32>
    tpu.vector_store %arg5[%c0_5, %c0_6], %5 {strides = array<i32>} : memref<16x256xf32, #tpu.memory_space<vmem>>, vector<16x256xf32>,
    return
  }
  func.func @transform_0(%arg0: i32, %arg1: i32) -> (i32, i32) {
    %c0_i32 = arith.constant 0 : i32
    %c0_i32_0 = arith.constant 0 : i32
    return %arg0, %c0_i32 : i32, i32
  }
  func.func @transform_1(%arg0: i32, %arg1: i32) -> (i32, i32) {
    %c0_i32 = arith.constant 0 : i32
    %c0_i32_0 = arith.constant 0 : i32
    return %c0_i32, %arg1 : i32, i32
  }
  func.func @transform_2(%arg0: i32, %arg1: i32) -> (i32, i32) {
    %c0_i32 = arith.constant 0 : i32
    %c0_i32_0 = arith.constant 0 : i32
    return %c0_i32, %arg1 : i32, i32
  }
  func.func @transform_3(%arg0: i32, %arg1: i32) -> (i32, i32) {
    %c0_i32 = arith.constant 0 : i32
    return %arg0, %arg1 : i32, i32
  }
}

</mosaic_0001>

<llo_original>
// kernel: segmentation_forward.10
$region0: #{segmentation_forward.10}
  #allocation0 [shape = 'u32[]', space=smem, size = 0x4, offset = 0x4, fixed_abs, tag = 'smem constant byte address 0x4 - core index']
  #allocation1 [shape = 'u32[72,128]{1,0:T(1,128)}', space=vmem, size = 0x9000, scoped, tag = 'internal scratch']
  %s0 = inlined_call_operand.vmem [shape: f32[128,128], index: 0, kind: input, shape index: {}]
  %s1 = inlined_call_operand.vmem [shape: f32[128,128], index: 1, kind: input, shape index: {}]
  %s2 = inlined_call_operand.vmem [shape: f32[1,128], index: 2, kind: input, shape index: {}]
  %s3 = inlined_call_operand.vmem [shape: f32[128,128], index: 3, kind: output, shape index: {}]
  %s4 = sld [smem:[#allocation0]]
  $region22: #{segmentation_forward.10} parent=0
    _
  %s6 = ssub.s32 1, %s4
  %s7 = scalar_select 0, %s6, %s4
  // Predicated region
  $region2: #{segmentation_forward.10} parent=0 // pred_check
    _
  $region3: #{segmentation_forward.10} parent=0 // pred_check_branch
    %9 = sbr.rel (0) target = $region5
  $region4: #{segmentation_forward.10} parent=0 // pred_region
    _
  $region5: #{segmentation_forward.10} parent=0 // pred_fallthru
    _
  // Predicated region
  $region6: #{segmentation_forward.10} parent=0 // pred_check
    _
  $region7: #{segmentation_forward.10} parent=0 // pred_check_branch
    %11 = sbr.rel (0) target = $region9
  $region8: #{segmentation_forward.10} parent=0 // pred_region
    _
  $region9: #{segmentation_forward.10} parent=0 // pred_fallthru
    _
  // Predicated region
  $region10: #{segmentation_forward.10} parent=0 // pred_check
    _
  $region11: #{segmentation_forward.10} parent=0 // pred_check_branch
    %13 = sbr.rel (0) target = $region13
  $region12: #{segmentation_forward.10} parent=0 // pred_region
    _
  $region13: #{segmentation_forward.10} parent=0 // pred_fallthru
    _
  %v14 = vld [vmem:[%s0] sm:$0xff]
  %v15 = vld [vmem:[%s0 + $0x8] sm:$0xff]
  %v16 = vld [vmem:[%s0 + $0x10] sm:$0xff]
  %v17 = vld [vmem:[%s0 + $0x18] sm:$0xff]
  %v18 = vld [vmem:[%s0 + $0x20] sm:$0xff]
  %v19 = vld [vmem:[%s0 + $0x28] sm:$0xff]
  %v20 = vld [vmem:[%s0 + $0x30] sm:$0xff]
  %v21 = vld [vmem:[%s0 + $0x38] sm:$0xff]
  %v22 = vld [vmem:[%s0 + $0x40] sm:$0xff]
  %v23 = vld [vmem:[%s0 + $0x48] sm:$0xff]
  %v24 = vld [vmem:[%s0 + $0x50] sm:$0xff]
  %v25 = vld [vmem:[%s0 + $0x58] sm:$0xff]
  %v26 = vld [vmem:[%s0 + $0x60] sm:$0xff]
  %v27 = vld [vmem:[%s0 + $0x68] sm:$0xff]
  %v28 = vld [vmem:[%s0 + $0x70] sm:$0xff]
  %v29 = vld [vmem:[%s0 + $0x78] sm:$0xff]
  %v30 = vld [vmem:[%s1] sm:$0xff]
  %v31 = vld [vmem:[%s1 + $0x8] sm:$0xff]
  %v32 = vld [vmem:[%s1 + $0x10] sm:$0xff]
  %v33 = vld [vmem:[%s1 + $0x18] sm:$0xff]
  %v34 = vld [vmem:[%s1 + $0x20] sm:$0xff]
  %v35 = vld [vmem:[%s1 + $0x28] sm:$0xff]
  %v36 = vld [vmem:[%s1 + $0x30] sm:$0xff]
  %v37 = vld [vmem:[%s1 + $0x38] sm:$0xff]
  %v38 = vld [vmem:[%s1 + $0x40] sm:$0xff]
  %v39 = vld [vmem:[%s1 + $0x48] sm:$0xff]
  %v40 = vld [vmem:[%s1 + $0x50] sm:$0xff]
  %v41 = vld [vmem:[%s1 + $0x58] sm:$0xff]
  %v42 = vld [vmem:[%s1 + $0x60] sm:$0xff]
  %v43 = vld [vmem:[%s1 + $0x68] sm:$0xff]
  %v44 = vld [vmem:[%s1 + $0x70] sm:$0xff]
  %v45 = vld [vmem:[%s1 + $0x78] sm:$0xff]
  %v46 = vld [vmem:[%s2] sm:$0x1]
  %v48 = vperm.slane %v46, 0
  %50 = vmatpush.msra.mxu0 %v45
  %51 = vmatpush.msra.mxu0 %v44
  %52 = vmatpush.msra.mxu0 %v43
  %53 = vmatpush.msra.mxu0 %v42
  %54 = vmatpush.msra.mxu0 %v41
  %55 = vmatpush.msra.mxu0 %v40
  %56 = vmatpush.msra.mxu0 %v39
  %57 = vmatpush.msra.mxu0 %v38
  %58 = vmatpush.msra.mxu0 %v37
  %59 = vmatpush.msra.mxu0 %v36
  %60 = vmatpush.msra.mxu0 %v35
  %61 = vmatpush.msra.mxu0 %v34
  %62 = vmatpush.msra.mxu0 %v33
  %63 = vmatpush.msra.mxu0 %v32
  %64 = vmatpush.msra.mxu0 %v31
  %65 = vmatpush.msra.mxu0 %v30
  %66 = vmatmul.f32.gmra.mxu0 %v14
  %v67 = vpop.f32.mrf.mxu0
  %v68 = vadd.f32 %v48, %v67
  %69 = vmatmul.f32.gmra.mxu0 %v15
  %v70 = vpop.f32.mrf.mxu0
  %v71 = vadd.f32 %v48, %v70
  %72 = vmatmul.f32.gmra.mxu0 %v16
  %v73 = vpop.f32.mrf.mxu0
  %v74 = vadd.f32 %v48, %v73
  %75 = vmatmul.f32.gmra.mxu0 %v17
  %v76 = vpop.f32.mrf.mxu0
  %v77 = vadd.f32 %v48, %v76
  %78 = vmatmul.f32.gmra.mxu0 %v18
  %v79 = vpop.f32.mrf.mxu0
  %v80 = vadd.f32 %v48, %v79
  %81 = vmatmul.f32.gmra.mxu0 %v19
  %v82 = vpop.f32.mrf.mxu0
  %v83 = vadd.f32 %v48, %v82
  %84 = vmatmul.f32.gmra.mxu0 %v20
  %v85 = vpop.f32.mrf.mxu0
  %v86 = vadd.f32 %v48, %v85
  %87 = vmatmul.f32.gmra.mxu0 %v21
  %v88 = vpop.f32.mrf.mxu0
  %v89 = vadd.f32 %v48, %v88
  %90 = vmatmul.f32.gmra.mxu0 %v22
  %v91 = vpop.f32.mrf.mxu0
  %v92 = vadd.f32 %v48, %v91
  %93 = vmatmul.f32.gmra.mxu0 %v23
  %v94 = vpop.f32.mrf.mxu0
  %v95 = vadd.f32 %v48, %v94
  %96 = vmatmul.f32.gmra.mxu0 %v24
  %v97 = vpop.f32.mrf.mxu0
  %v98 = vadd.f32 %v48, %v97
  %99 = vmatmul.f32.gmra.mxu0 %v25
  %v100 = vpop.f32.mrf.mxu0
  %v101 = vadd.f32 %v48, %v100
  %102 = vmatmul.f32.gmra.mxu0 %v26
  %v103 = vpop.f32.mrf.mxu0
  %v104 = vadd.f32 %v48, %v103
  %105 = vmatmul.f32.gmra.mxu0 %v27
  %v106 = vpop.f32.mrf.mxu0
  %v107 = vadd.f32 %v48, %v106
  %108 = vmatmul.f32.gmra.mxu0 %v28
  %v109 = vpop.f32.mrf.mxu0
  %v110 = vadd.f32 %v48, %v109
  %111 = vmatmul.f32.gmra.mxu0 %v29
  %v112 = vpop.f32.mrf.mxu0
  %v113 = vadd.f32 %v48, %v112
  %114 = vdwg.mxu0
  %v115 = vmax.f32 %v68, 0.0
  %v116 = vmax.f32 %v71, 0.0
  %v117 = vmax.f32 %v74, 0.0
  %v118 = vmax.f32 %v77, 0.0
  %v119 = vmax.f32 %v80, 0.0
  %v120 = vmax.f32 %v83, 0.0
  %v121 = vmax.f32 %v86, 0.0
  %v122 = vmax.f32 %v89, 0.0
  %v123 = vmax.f32 %v92, 0.0
  %v124 = vmax.f32 %v95, 0.0
  %v125 = vmax.f32 %v98, 0.0
  %v126 = vmax.f32 %v101, 0.0
  %v127 = vmax.f32 %v104, 0.0
  %v128 = vmax.f32 %v107, 0.0
  %v129 = vmax.f32 %v110, 0.0
  %v130 = vmax.f32 %v113, 0.0
  %131 = vst [vmem:[%s3] sm:$0xff] %v115
  %132 = vst [vmem:[%s3 + $0x8] sm:$0xff] %v116
  %133 = vst [vmem:[%s3 + $0x10] sm:$0xff] %v117
  %134 = vst [vmem:[%s3 + $0x18] sm:$0xff] %v118
  %135 = vst [vmem:[%s3 + $0x20] sm:$0xff] %v119
  %136 = vst [vmem:[%s3 + $0x28] sm:$0xff] %v120
  %137 = vst [vmem:[%s3 + $0x30] sm:$0xff] %v121
  %138 = vst [vmem:[%s3 + $0x38] sm:$0xff] %v122
  %139 = vst [vmem:[%s3 + $0x40] sm:$0xff] %v123
  %140 = vst [vmem:[%s3 + $0x48] sm:$0xff] %v124
  %141 = vst [vmem:[%s3 + $0x50] sm:$0xff] %v125
  %142 = vst [vmem:[%s3 + $0x58] sm:$0xff] %v126
  %143 = vst [vmem:[%s3 + $0x60] sm:$0xff] %v127
  %144 = vst [vmem:[%s3 + $0x68] sm:$0xff] %v128
  %145 = vst [vmem:[%s3 + $0x70] sm:$0xff] %v129
  %146 = vst [vmem:[%s3 + $0x78] sm:$0xff] %v130
  // Predicated region
  $region14: #{segmentation_forward.10} parent=0 // pred_check
    _
  $region15: #{segmentation_forward.10} parent=0 // pred_check_branch
    %148 = sbr.rel (0) target = $region17
  $region16: #{segmentation_forward.10} parent=0 // pred_region
    _
  $region17: #{segmentation_forward.10} parent=0 // pred_fallthru
    _
  // Predicated region
  $region18: #{segmentation_forward.10} parent=0 // pred_check
    _
  $region19: #{segmentation_forward.10} parent=0 // pred_check_branch
    %150 = sbr.rel (0) target = $region21
  $region20: #{segmentation_forward.10} parent=0 // pred_region
    _
  $region21: #{segmentation_forward.10} parent=0 // pred_fallthru
    _

// kernel: segmentation_forward.16
$region0: #{segmentation_forward.16}
  #allocation0 [shape = 'u32[]', space=smem, size = 0x4, offset = 0x4, fixed_abs, tag = 'smem constant byte address 0x4 - core index']
  #allocation1 [shape = 'u32[72,128]{1,0:T(1,128)}', space=vmem, size = 0x9000, scoped, tag = 'internal scratch']
  %s0 = inlined_call_operand.vmem [shape: f32[128,384], index: 0, kind: input, shape index: {}]
  %s1 = inlined_call_operand.vmem [shape: f32[384,128], index: 1, kind: input, shape index: {}]
  %s2 = inlined_call_operand.vmem [shape: f32[1,128], index: 2, kind: input, shape index: {}]
  %s3 = inlined_call_operand.vmem [shape: f32[128,128], index: 3, kind: output, shape index: {}]
  %s4 = sld [smem:[#allocation0]]
  $region22: #{segmentation_forward.16} parent=0
    _
  %s6 = ssub.s32 1, %s4
  %s7 = scalar_select 0, %s6, %s4
  // Predicated region
  $region2: #{segmentation_forward.16} parent=0 // pred_check
    _
  $region3: #{segmentation_forward.16} parent=0 // pred_check_branch
    %9 = sbr.rel (0) target = $region5
  $region4: #{segmentation_forward.16} parent=0 // pred_region
    _
  $region5: #{segmentation_forward.16} parent=0 // pred_fallthru
    _
  // Predicated region
  $region6: #{segmentation_forward.16} parent=0 // pred_check
    _
  $region7: #{segmentation_forward.16} parent=0 // pred_check_branch
    %11 = sbr.rel (0) target = $region9
  $region8: #{segmentation_forward.16} parent=0 // pred_region
    _
  $region9: #{segmentation_forward.16} parent=0 // pred_fallthru
    _
  // Predicated region
  $region10: #{segmentation_forward.16} parent=0 // pred_check
    _
  $region11: #{segmentation_forward.16} parent=0 // pred_check_branch
    %13 = sbr.rel (0) target = $region13
  $region12: #{segmentation_forward.16} parent=0 // pred_region
    _
  $region13: #{segmentation_forward.16} parent=0 // pred_fallthru
    _
  %v14 = vld [vmem:[%s0] sm:$0xff]
  %v15 = vld [vmem:[%s0 + $0x8] sm:$0xff]
  %v16 = vld [vmem:[%s0 + $0x10] sm:$0xff]
  %v17 = vld [vmem:[%s0 + $0x18] sm:$0xff]
  %v18 = vld [vmem:[%s0 + $0x20] sm:$0xff]
  %v19 = vld [vmem:[%s0 + $0x28] sm:$0xff]
  %v20 = vld [vmem:[%s0 + $0x30] sm:$0xff]
  %v21 = vld [vmem:[%s0 + $0x38] sm:$0xff]
  %v22 = vld [vmem:[%s0 + $0x40] sm:$0xff]
  %v23 = vld [vmem:[%s0 + $0x48] sm:$0xff]
  %v24 = vld [vmem:[%s0 + $0x50] sm:$0xff]
  %v25 = vld [vmem:[%s0 + $0x58] sm:$0xff]
  %v26 = vld [vmem:[%s0 + $0x60] sm:$0xff]
  %v27 = vld [vmem:[%s0 + $0x68] sm:$0xff]
  %v28 = vld [vmem:[%s0 + $0x70] sm:$0xff]
  %v29 = vld [vmem:[%s0 + $0x78] sm:$0xff]
  %v30 = vld [vmem:[%s0 + $0x80] sm:$0xff]
  %v31 = vld [vmem:[%s0 + $0x88] sm:$0xff]
  %v32 = vld [vmem:[%s0 + $0x90] sm:$0xff]
  %v33 = vld [vmem:[%s0 + $0x98] sm:$0xff]
  %v34 = vld [vmem:[%s0 + $0xa0] sm:$0xff]
  %v35 = vld [vmem:[%s0 + $0xa8] sm:$0xff]
  %v36 = vld [vmem:[%s0 + $0xb0] sm:$0xff]
  %v37 = vld [vmem:[%s0 + $0xb8] sm:$0xff]
  %v38 = vld [vmem:[%s0 + $0xc0] sm:$0xff]
  %v39 = vld [vmem:[%s0 + $0xc8] sm:$0xff]
  %v40 = vld [vmem:[%s0 + $0xd0] sm:$0xff]
  %v41 = vld [vmem:[%s0 + $0xd8] sm:$0xff]
  %v42 = vld [vmem:[%s0 + $0xe0] sm:$0xff]
  %v43 = vld [vmem:[%s0 + $0xe8] sm:$0xff]
  %v44 = vld [vmem:[%s0 + $0xf0] sm:$0xff]
  %v45 = vld [vmem:[%s0 + $0xf8] sm:$0xff]
  %v46 = vld [vmem:[%s0 + $0x100] sm:$0xff]
  %v47 = vld [vmem:[%s0 + $0x108] sm:$0xff]
  %v48 = vld [vmem:[%s0 + $0x110] sm:$0xff]
  %v49 = vld [vmem:[%s0 + $0x118] sm:$0xff]
  %v50 = vld [vmem:[%s0 + $0x120] sm:$0xff]
  %v51 = vld [vmem:[%s0 + $0x128] sm:$0xff]
  %v52 = vld [vmem:[%s0 + $0x130] sm:$0xff]
  %v53 = vld [vmem:[%s0 + $0x138] sm:$0xff]
  %v54 = vld [vmem:[%s0 + $0x140] sm:$0xff]
  %v55 = vld [vmem:[%s0 + $0x148] sm:$0xff]
  %v56 = vld [vmem:[%s0 + $0x150] sm:$0xff]
  %v57 = vld [vmem:[%s0 + $0x158] sm:$0xff]
  %v58 = vld [vmem:[%s0 + $0x160] sm:$0xff]
  %v59 = vld [vmem:[%s0 + $0x168] sm:$0xff]
  %v60 = vld [vmem:[%s0 + $0x170] sm:$0xff]
  %v61 = vld [vmem:[%s0 + $0x178] sm:$0xff]
  %v62 = vld [vmem:[%s1] sm:$0xff]
  %v63 = vld [vmem:[%s1 + $0x8] sm:$0xff]
  %v64 = vld [vmem:[%s1 + $0x10] sm:$0xff]
  %v65 = vld [vmem:[%s1 + $0x18] sm:$0xff]
  %v66 = vld [vmem:[%s1 + $0x20] sm:$0xff]
  %v67 = vld [vmem:[%s1 + $0x28] sm:$0xff]
  %v68 = vld [vmem:[%s1 + $0x30] sm:$0xff]
  %v69 = vld [vmem:[%s1 + $0x38] sm:$0xff]
  %v70 = vld [vmem:[%s1 + $0x40] sm:$0xff]
  %v71 = vld [vmem:[%s1 + $0x48] sm:$0xff]
  %v72 = vld [vmem:[%s1 + $0x50] sm:$0xff]
  %v73 = vld [vmem:[%s1 + $0x58] sm:$0xff]
  %v74 = vld [vmem:[%s1 + $0x60] sm:$0xff]
  %v75 = vld [vmem:[%s1 + $0x68] sm:$0xff]
  %v76 = vld [vmem:[%s1 + $0x70] sm:$0xff]
  %v77 = vld [vmem:[%s1 + $0x78] sm:$0xff]
  %v78 = vld [vmem:[%s1 + $0x80] sm:$0xff]
  %v79 = vld [vmem:[%s1 + $0x88] sm:$0xff]
  %v80 = vld [vmem:[%s1 + $0x90] sm:$0xff]
  %v81 = vld [vmem:[%s1 + $0x98] sm:$0xff]
  %v82 = vld [vmem:[%s1 + $0xa0] sm:$0xff]
  %v83 = vld [vmem:[%s1 + $0xa8] sm:$0xff]
  %v84 = vld [vmem:[%s1 + $0xb0] sm:$0xff]
  %v85 = vld [vmem:[%s1 + $0xb8] sm:$0xff]
  %v86 = vld [vmem:[%s1 + $0xc0] sm:$0xff]
  %v87 = vld [vmem:[%s1 + $0xc8] sm:$0xff]
  %v88 = vld [vmem:[%s1 + $0xd0] sm:$0xff]
  %v89 = vld [vmem:[%s1 + $0xd8] sm:$0xff]
  %v90 = vld [vmem:[%s1 + $0xe0] sm:$0xff]
  %v91 = vld [vmem:[%s1 + $0xe8] sm:$0xff]
  %v92 = vld [vmem:[%s1 + $0xf0] sm:$0xff]
  %v93 = vld [vmem:[%s1 + $0xf8] sm:$0xff]
  %v94 = vld [vmem:[%s1 + $0x100] sm:$0xff]
  %v95 = vld [vmem:[%s1 + $0x108] sm:$0xff]
  %v96 = vld [vmem:[%s1 + $0x110] sm:$0xff]
  %v97 = vld [vmem:[%s1 + $0x118] sm:$0xff]
  %v98 = vld [vmem:[%s1 + $0x120] sm:$0xff]
  %v99 = vld [vmem:[%s1 + $0x128] sm:$0xff]
  %v100 = vld [vmem:[%s1 + $0x130] sm:$0xff]
  %v101 = vld [vmem:[%s1 + $0x138] sm:$0xff]
  %v102 = vld [vmem:[%s1 + $0x140] sm:$0xff]
  %v103 = vld [vmem:[%s1 + $0x148] sm:$0xff]
  %v104 = vld [vmem:[%s1 + $0x150] sm:$0xff]
  %v105 = vld [vmem:[%s1 + $0x158] sm:$0xff]
  %v106 = vld [vmem:[%s1 + $0x160] sm:$0xff]
  %v107 = vld [vmem:[%s1 + $0x168] sm:$0xff]
  %v108 = vld [vmem:[%s1 + $0x170] sm:$0xff]
  %v109 = vld [vmem:[%s1 + $0x178] sm:$0xff]
  %v110 = vld [vmem:[%s2] sm:$0x1]
  %v112 = vperm.slane %v110, 0
  %114 = vmatpush.msra.mxu0 %v77
  %115 = vmatpush.msra.mxu0 %v76
  %116 = vmatpush.msra.mxu0 %v75
  %117 = vmatpush.msra.mxu0 %v74
  %118 = vmatpush.msra.mxu0 %v73
  %119 = vmatpush.msra.mxu0 %v72
  %120 = vmatpush.msra.mxu0 %v71
  %121 = vmatpush.msra.mxu0 %v70
  %122 = vmatpush.msra.mxu0 %v69
  %123 = vmatpush.msra.mxu0 %v68
  %124 = vmatpush.msra.mxu0 %v67
  %125 = vmatpush.msra.mxu0 %v66
  %126 = vmatpush.msra.mxu0 %v65
  %127 = vmatpush.msra.mxu0 %v64
  %128 = vmatpush.msra.mxu0 %v63
  %129 = vmatpush.msra.mxu0 %v62
  %130 = vmatmul.f32.gmra.mxu0 %v14
  %v131 = vpop.f32.mrf.mxu0
  %v132 = vadd.f32 %v112, %v131
  %133 = vmatmul.f32.gmra.mxu0 %v17
  %v134 = vpop.f32.mrf.mxu0
  %v135 = vadd.f32 %v112, %v134
  %136 = vmatmul.f32.gmra.mxu0 %v20
  %v137 = vpop.f32.mrf.mxu0
  %v138 = vadd.f32 %v112, %v137
  %139 = vmatmul.f32.gmra.mxu0 %v23
  %v140 = vpop.f32.mrf.mxu0
  %v141 = vadd.f32 %v112, %v140
  %142 = vmatmul.f32.gmra.mxu0 %v26
  %v143 = vpop.f32.mrf.mxu0
  %v144 = vadd.f32 %v112, %v143
  %145 = vmatmul.f32.gmra.mxu0 %v29
  %v146 = vpop.f32.mrf.mxu0
  %v147 = vadd.f32 %v112, %v146
  %148 = vmatmul.f32.gmra.mxu0 %v32
  %v149 = vpop.f32.mrf.mxu0
  %v150 = vadd.f32 %v112, %v149
  %151 = vmatmul.f32.gmra.mxu0 %v35
  %v152 = vpop.f32.mrf.mxu0
  %v153 = vadd.f32 %v112, %v152
  %154 = vmatmul.f32.gmra.mxu0 %v38
  %v155 = vpop.f32.mrf.mxu0
  %v156 = vadd.f32 %v112, %v155
  %157 = vmatmul.f32.gmra.mxu0 %v41
  %v158 = vpop.f32.mrf.mxu0
  %v159 = vadd.f32 %v112, %v158
  %160 = vmatmul.f32.gmra.mxu0 %v44
  %v161 = vpop.f32.mrf.mxu0
  %v162 = vadd.f32 %v112, %v161
  %163 = vmatmul.f32.gmra.mxu0 %v47
  %v164 = vpop.f32.mrf.mxu0
  %v165 = vadd.f32 %v112, %v164
  %166 = vmatmul.f32.gmra.mxu0 %v50
  %v167 = vpop.f32.mrf.mxu0
  %v168 = vadd.f32 %v112, %v167
  %169 = vmatmul.f32.gmra.mxu0 %v53
  %v170 = vpop.f32.mrf.mxu0
  %v171 = vadd.f32 %v112, %v170
  %172 = vmatmul.f32.gmra.mxu0 %v56
  %v173 = vpop.f32.mrf.mxu0
  %v174 = vadd.f32 %v112, %v173
  %175 = vmatmul.f32.gmra.mxu0 %v59
  %v176 = vpop.f32.mrf.mxu0
  %v177 = vadd.f32 %v112, %v176
  %178 = vdwg.mxu0
  %179 = vmatpush.msra.mxu0 %v93
  %180 = vmatpush.msra.mxu0 %v92
  %181 = vmatpush.msra.mxu0 %v91
  %182 = vmatpush.msra.mxu0 %v90
  %183 = vmatpush.msra.mxu0 %v89
  %184 = vmatpush.msra.mxu0 %v88
  %185 = vmatpush.msra.mxu0 %v87
  %186 = vmatpush.msra.mxu0 %v86
  %187 = vmatpush.msra.mxu0 %v85
  %188 = vmatpush.msra.mxu0 %v84
  %189 = vmatpush.msra.mxu0 %v83
  %190 = vmatpush.msra.mxu0 %v82
  %191 = vmatpush.msra.mxu0 %v81
  %192 = vmatpush.msra.mxu0 %v80
  %193 = vmatpush.msra.mxu0 %v79
  %194 = vmatpush.msra.mxu0 %v78
  %195 = vmatmul.f32.gmra.mxu0 %v15
  %v196 = vpop.f32.mrf.mxu0
  %v197 = vadd.f32 %v132, %v196
  %198 = vmatmul.f32.gmra.mxu0 %v18
  %v199 = vpop.f32.mrf.mxu0
  %v200 = vadd.f32 %v135, %v199
  %201 = vmatmul.f32.gmra.mxu0 %v21
  %v202 = vpop.f32.mrf.mxu0
  %v203 = vadd.f32 %v138, %v202
  %204 = vmatmul.f32.gmra.mxu0 %v24
  %v205 = vpop.f32.mrf.mxu0
  %v206 = vadd.f32 %v141, %v205
  %207 = vmatmul.f32.gmra.mxu0 %v27
  %v208 = vpop.f32.mrf.mxu0
  %v209 = vadd.f32 %v144, %v208
  %210 = vmatmul.f32.gmra.mxu0 %v30
  %v211 = vpop.f32.mrf.mxu0
  %v212 = vadd.f32 %v147, %v211
  %213 = vmatmul.f32.gmra.mxu0 %v33
  %v214 = vpop.f32.mrf.mxu0
  %v215 = vadd.f32 %v150, %v214
  %216 = vmatmul.f32.gmra.mxu0 %v36
  %v217 = vpop.f32.mrf.mxu0
  %v218 = vadd.f32 %v153, %v217
  %219 = vmatmul.f32.gmra.mxu0 %v39
  %v220 = vpop.f32.mrf.mxu0
  %v221 = vadd.f32 %v156, %v220
  %222 = vmatmul.f32.gmra.mxu0 %v42
  %v223 = vpop.f32.mrf.mxu0
  %v224 = vadd.f32 %v159, %v223
  %225 = vmatmul.f32.gmra.mxu0 %v45
  %v226 = vpop.f32.mrf.mxu0
  %v227 = vadd.f32 %v162, %v226
  %228 = vmatmul.f32.gmra.mxu0 %v48
  %v229 = vpop.f32.mrf.mxu0
  %v230 = vadd.f32 %v165, %v229
  %231 = vmatmul.f32.gmra.mxu0 %v51
  %v232 = vpop.f32.mrf.mxu0
  %v233 = vadd.f32 %v168, %v232
  %234 = vmatmul.f32.gmra.mxu0 %v54
  %v235 = vpop.f32.mrf.mxu0
  %v236 = vadd.f32 %v171, %v235
  %237 = vmatmul.f32.gmra.mxu0 %v57
  %v238 = vpop.f32.mrf.mxu0
  %v239 = vadd.f32 %v174, %v238
  %240 = vmatmul.f32.gmra.mxu0 %v60
  %v241 = vpop.f32.mrf.mxu0
  %v242 = vadd.f32 %v177, %v241
  %243 = vdwg.mxu0
  %244 = vmatpush.msra.mxu0 %v109
  %245 = vmatpush.msra.mxu0 %v108
  %246 = vmatpush.msra.mxu0 %v107
  %247 = vmatpush.msra.mxu0 %v106
  %248 = vmatpush.msra.mxu0 %v105
  %249 = vmatpush.msra.mxu0 %v104
  %250 = vmatpush.msra.mxu0 %v103
  %251 = vmatpush.msra.mxu0 %v102
  %252 = vmatpush.msra.mxu0 %v101
  %253 = vmatpush.msra.mxu0 %v100
  %254 = vmatpush.msra.mxu0 %v99
  %255 = vmatpush.msra.mxu0 %v98
  %256 = vmatpush.msra.mxu0 %v97
  %257 = vmatpush.msra.mxu0 %v96
  %258 = vmatpush.msra.mxu0 %v95
  %259 = vmatpush.msra.mxu0 %v94
  %260 = vmatmul.f32.gmra.mxu0 %v16
  %v261 = vpop.f32.mrf.mxu0
  %v262 = vadd.f32 %v197, %v261
  %263 = vmatmul.f32.gmra.mxu0 %v19
  %v264 = vpop.f32.mrf.mxu0
  %v265 = vadd.f32 %v200, %v264
  %266 = vmatmul.f32.gmra.mxu0 %v22
  %v267 = vpop.f32.mrf.mxu0
  %v268 = vadd.f32 %v203, %v267
  %269 = vmatmul.f32.gmra.mxu0 %v25
  %v270 = vpop.f32.mrf.mxu0
  %v271 = vadd.f32 %v206, %v270
  %272 = vmatmul.f32.gmra.mxu0 %v28
  %v273 = vpop.f32.mrf.mxu0
  %v274 = vadd.f32 %v209, %v273
  %275 = vmatmul.f32.gmra.mxu0 %v31
  %v276 = vpop.f32.mrf.mxu0
  %v277 = vadd.f32 %v212, %v276
  %278 = vmatmul.f32.gmra.mxu0 %v34
  %v279 = vpop.f32.mrf.mxu0
  %v280 = vadd.f32 %v215, %v279
  %281 = vmatmul.f32.gmra.mxu0 %v37
  %v282 = vpop.f32.mrf.mxu0
  %v283 = vadd.f32 %v218, %v282
  %284 = vmatmul.f32.gmra.mxu0 %v40
  %v285 = vpop.f32.mrf.mxu0
  %v286 = vadd.f32 %v221, %v285
  %287 = vmatmul.f32.gmra.mxu0 %v43
  %v288 = vpop.f32.mrf.mxu0
  %v289 = vadd.f32 %v224, %v288
  %290 = vmatmul.f32.gmra.mxu0 %v46
  %v291 = vpop.f32.mrf.mxu0
  %v292 = vadd.f32 %v227, %v291
  %293 = vmatmul.f32.gmra.mxu0 %v49
  %v294 = vpop.f32.mrf.mxu0
  %v295 = vadd.f32 %v230, %v294
  %296 = vmatmul.f32.gmra.mxu0 %v52
  %v297 = vpop.f32.mrf.mxu0
  %v298 = vadd.f32 %v233, %v297
  %299 = vmatmul.f32.gmra.mxu0 %v55
  %v300 = vpop.f32.mrf.mxu0
  %v301 = vadd.f32 %v236, %v300
  %302 = vmatmul.f32.gmra.mxu0 %v58
  %v303 = vpop.f32.mrf.mxu0
  %v304 = vadd.f32 %v239, %v303
  %305 = vmatmul.f32.gmra.mxu0 %v61
  %v306 = vpop.f32.mrf.mxu0
  %v307 = vadd.f32 %v242, %v306
  %308 = vdwg.mxu0
  %v309 = vmax.f32 %v262, 0.0
  %v310 = vmax.f32 %v265, 0.0
  %v311 = vmax.f32 %v268, 0.0
  %v312 = vmax.f32 %v271, 0.0
  %v313 = vmax.f32 %v274, 0.0
  %v314 = vmax.f32 %v277, 0.0
  %v315 = vmax.f32 %v280, 0.0
  %v316 = vmax.f32 %v283, 0.0
  %v317 = vmax.f32 %v286, 0.0
  %v318 = vmax.f32 %v289, 0.0
  %v319 = vmax.f32 %v292, 0.0
  %v320 = vmax.f32 %v295, 0.0
  %v321 = vmax.f32 %v298, 0.0
  %v322 = vmax.f32 %v301, 0.0
  %v323 = vmax.f32 %v304, 0.0
  %v324 = vmax.f32 %v307, 0.0
  %325 = vst [vmem:[%s3] sm:$0xff] %v309
  %326 = vst [vmem:[%s3 + $0x8] sm:$0xff] %v310
  %327 = vst [vmem:[%s3 + $0x10] sm:$0xff] %v311
  %328 = vst [vmem:[%s3 + $0x18] sm:$0xff] %v312
  %329 = vst [vmem:[%s3 + $0x20] sm:$0xff] %v313
  %330 = vst [vmem:[%s3 + $0x28] sm:$0xff] %v314
  %331 = vst [vmem:[%s3 + $0x30] sm:$0xff] %v315
  %332 = vst [vmem:[%s3 + $0x38] sm:$0xff] %v316
  %333 = vst [vmem:[%s3 + $0x40] sm:$0xff] %v317
  %334 = vst [vmem:[%s3 + $0x48] sm:$0xff] %v318
  %335 = vst [vmem:[%s3 + $0x50] sm:$0xff] %v319
  %336 = vst [vmem:[%s3 + $0x58] sm:$0xff] %v320
  %337 = vst [vmem:[%s3 + $0x60] sm:$0xff] %v321
  %338 = vst [vmem:[%s3 + $0x68] sm:$0xff] %v322
  %339 = vst [vmem:[%s3 + $0x70] sm:$0xff] %v323
  %340 = vst [vmem:[%s3 + $0x78] sm:$0xff] %v324
  // Predicated region
  $region14: #{segmentation_forward.16} parent=0 // pred_check
    _
  $region15: #{segmentation_forward.16} parent=0 // pred_check_branch
    %342 = sbr.rel (0) target = $region17
  $region16: #{segmentation_forward.16} parent=0 // pred_region
    _
  $region17: #{segmentation_forward.16} parent=0 // pred_fallthru
    _
  // Predicated region
  $region18: #{segmentation_forward.16} parent=0 // pred_check
    _
  $region19: #{segmentation_forward.16} parent=0 // pred_check_branch
    %344 = sbr.rel (0) target = $region21
  $region20: #{segmentation_forward.16} parent=0 // pred_region
    _
  $region21: #{segmentation_forward.16} parent=0 // pred_fallthru
    _

// kernel: segmentation_forward.17
$region0: #{segmentation_forward.17}
  #allocation0 [shape = 'u32[]', space=smem, size = 0x4, offset = 0x4, fixed_abs, tag = 'smem constant byte address 0x4 - core index']
  #allocation1 [shape = 'u32[72,128]{1,0:T(1,128)}', space=vmem, size = 0x9000, scoped, tag = 'internal scratch']
  %s0 = inlined_call_operand.vmem [shape: f32[128,128], index: 0, kind: input, shape index: {}]
  %s1 = inlined_call_operand.vmem [shape: f32[128,128], index: 1, kind: input, shape index: {}]
  %s2 = inlined_call_operand.vmem [shape: f32[1,128], index: 2, kind: input, shape index: {}]
  %s3 = inlined_call_operand.vmem [shape: f32[128,128], index: 3, kind: output, shape index: {}]
  %s4 = sld [smem:[#allocation0]]
  $region22: #{segmentation_forward.17} parent=0
    _
  %s6 = ssub.s32 1, %s4
  %s7 = scalar_select 0, %s6, %s4
  // Predicated region
  $region2: #{segmentation_forward.17} parent=0 // pred_check
    _
  $region3: #{segmentation_forward.17} parent=0 // pred_check_branch
    %9 = sbr.rel (0) target = $region5
  $region4: #{segmentation_forward.17} parent=0 // pred_region
    _
  $region5: #{segmentation_forward.17} parent=0 // pred_fallthru
    _
  // Predicated region
  $region6: #{segmentation_forward.17} parent=0 // pred_check
    _
  $region7: #{segmentation_forward.17} parent=0 // pred_check_branch
    %11 = sbr.rel (0) target = $region9
  $region8: #{segmentation_forward.17} parent=0 // pred_region
    _
  $region9: #{segmentation_forward.17} parent=0 // pred_fallthru
    _
  // Predicated region
  $region10: #{segmentation_forward.17} parent=0 // pred_check
    _
  $region11: #{segmentation_forward.17} parent=0 // pred_check_branch
    %13 = sbr.rel (0) target = $region13
  $region12: #{segmentation_forward.17} parent=0 // pred_region
    _
  $region13: #{segmentation_forward.17} parent=0 // pred_fallthru
    _
  %v14 = vld [vmem:[%s0] sm:$0xff]
  %v15 = vld [vmem:[%s0 + $0x8] sm:$0xff]
  %v16 = vld [vmem:[%s0 + $0x10] sm:$0xff]
  %v17 = vld [vmem:[%s0 + $0x18] sm:$0xff]
  %v18 = vld [vmem:[%s0 + $0x20] sm:$0xff]
  %v19 = vld [vmem:[%s0 + $0x28] sm:$0xff]
  %v20 = vld [vmem:[%s0 + $0x30] sm:$0xff]
  %v21 = vld [vmem:[%s0 + $0x38] sm:$0xff]
  %v22 = vld [vmem:[%s0 + $0x40] sm:$0xff]
  %v23 = vld [vmem:[%s0 + $0x48] sm:$0xff]
  %v24 = vld [vmem:[%s0 + $0x50] sm:$0xff]
  %v25 = vld [vmem:[%s0 + $0x58] sm:$0xff]
  %v26 = vld [vmem:[%s0 + $0x60] sm:$0xff]
  %v27 = vld [vmem:[%s0 + $0x68] sm:$0xff]
  %v28 = vld [vmem:[%s0 + $0x70] sm:$0xff]
  %v29 = vld [vmem:[%s0 + $0x78] sm:$0xff]
  %v30 = vld [vmem:[%s1] sm:$0xff]
  %v31 = vld [vmem:[%s1 + $0x8] sm:$0xff]
  %v32 = vld [vmem:[%s1 + $0x10] sm:$0xff]
  %v33 = vld [vmem:[%s1 + $0x18] sm:$0xff]
  %v34 = vld [vmem:[%s1 + $0x20] sm:$0xff]
  %v35 = vld [vmem:[%s1 + $0x28] sm:$0xff]
  %v36 = vld [vmem:[%s1 + $0x30] sm:$0xff]
  %v37 = vld [vmem:[%s1 + $0x38] sm:$0xff]
  %v38 = vld [vmem:[%s1 + $0x40] sm:$0xff]
  %v39 = vld [vmem:[%s1 + $0x48] sm:$0xff]
  %v40 = vld [vmem:[%s1 + $0x50] sm:$0xff]
  %v41 = vld [vmem:[%s1 + $0x58] sm:$0xff]
  %v42 = vld [vmem:[%s1 + $0x60] sm:$0xff]
  %v43 = vld [vmem:[%s1 + $0x68] sm:$0xff]
  %v44 = vld [vmem:[%s1 + $0x70] sm:$0xff]
  %v45 = vld [vmem:[%s1 + $0x78] sm:$0xff]
  %v46 = vld [vmem:[%s2] sm:$0x1]
  %v48 = vperm.slane %v46, 0
  %50 = vmatpush.msra.mxu0 %v45
  %51 = vmatpush.msra.mxu0 %v44
  %52 = vmatpush.msra.mxu0 %v43
  %53 = vmatpush.msra.mxu0 %v42
  %54 = vmatpush.msra.mxu0 %v41
  %55 = vmatpush.msra.mxu0 %v40
  %56 = vmatpush.msra.mxu0 %v39
  %57 = vmatpush.msra.mxu0 %v38
  %58 = vmatpush.msra.mxu0 %v37
  %59 = vmatpush.msra.mxu0 %v36
  %60 = vmatpush.msra.mxu0 %v35
  %61 = vmatpush.msra.mxu0 %v34
  %62 = vmatpush.msra.mxu0 %v33
  %63 = vmatpush.msra.mxu0 %v32
  %64 = vmatpush.msra.mxu0 %v31
  %65 = vmatpush.msra.mxu0 %v30
  %66 = vmatmul.f32.gmra.mxu0 %v14
  %v67 = vpop.f32.mrf.mxu0
  %v68 = vadd.f32 %v48, %v67
  %69 = vmatmul.f32.gmra.mxu0 %v15
  %v70 = vpop.f32.mrf.mxu0
  %v71 = vadd.f32 %v48, %v70
  %72 = vmatmul.f32.gmra.mxu0 %v16
  %v73 = vpop.f32.mrf.mxu0
  %v74 = vadd.f32 %v48, %v73
  %75 = vmatmul.f32.gmra.mxu0 %v17
  %v76 = vpop.f32.mrf.mxu0
  %v77 = vadd.f32 %v48, %v76
  %78 = vmatmul.f32.gmra.mxu0 %v18
  %v79 = vpop.f32.mrf.mxu0
  %v80 = vadd.f32 %v48, %v79
  %81 = vmatmul.f32.gmra.mxu0 %v19
  %v82 = vpop.f32.mrf.mxu0
  %v83 = vadd.f32 %v48, %v82
  %84 = vmatmul.f32.gmra.mxu0 %v20
  %v85 = vpop.f32.mrf.mxu0
  %v86 = vadd.f32 %v48, %v85
  %87 = vmatmul.f32.gmra.mxu0 %v21
  %v88 = vpop.f32.mrf.mxu0
  %v89 = vadd.f32 %v48, %v88
  %90 = vmatmul.f32.gmra.mxu0 %v22
  %v91 = vpop.f32.mrf.mxu0
  %v92 = vadd.f32 %v48, %v91
  %93 = vmatmul.f32.gmra.mxu0 %v23
  %v94 = vpop.f32.mrf.mxu0
  %v95 = vadd.f32 %v48, %v94
  %96 = vmatmul.f32.gmra.mxu0 %v24
  %v97 = vpop.f32.mrf.mxu0
  %v98 = vadd.f32 %v48, %v97
  %99 = vmatmul.f32.gmra.mxu0 %v25
  %v100 = vpop.f32.mrf.mxu0
  %v101 = vadd.f32 %v48, %v100
  %102 = vmatmul.f32.gmra.mxu0 %v26
  %v103 = vpop.f32.mrf.mxu0
  %v104 = vadd.f32 %v48, %v103
  %105 = vmatmul.f32.gmra.mxu0 %v27
  %v106 = vpop.f32.mrf.mxu0
  %v107 = vadd.f32 %v48, %v106
  %108 = vmatmul.f32.gmra.mxu0 %v28
  %v109 = vpop.f32.mrf.mxu0
  %v110 = vadd.f32 %v48, %v109
  %111 = vmatmul.f32.gmra.mxu0 %v29
  %v112 = vpop.f32.mrf.mxu0
  %v113 = vadd.f32 %v48, %v112
  %114 = vdwg.mxu0
  %115 = vst [vmem:[%s3] sm:$0xff] %v68
  %116 = vst [vmem:[%s3 + $0x8] sm:$0xff] %v71
  %117 = vst [vmem:[%s3 + $0x10] sm:$0xff] %v74
  %118 = vst [vmem:[%s3 + $0x18] sm:$0xff] %v77
  %119 = vst [vmem:[%s3 + $0x20] sm:$0xff] %v80
  %120 = vst [vmem:[%s3 + $0x28] sm:$0xff] %v83
  %121 = vst [vmem:[%s3 + $0x30] sm:$0xff] %v86
  %122 = vst [vmem:[%s3 + $0x38] sm:$0xff] %v89
  %123 = vst [vmem:[%s3 + $0x40] sm:$0xff] %v92
  %124 = vst [vmem:[%s3 + $0x48] sm:$0xff] %v95
  %125 = vst [vmem:[%s3 + $0x50] sm:$0xff] %v98
  %126 = vst [vmem:[%s3 + $0x58] sm:$0xff] %v101
  %127 = vst [vmem:[%s3 + $0x60] sm:$0xff] %v104
  %128 = vst [vmem:[%s3 + $0x68] sm:$0xff] %v107
  %129 = vst [vmem:[%s3 + $0x70] sm:$0xff] %v110
  %130 = vst [vmem:[%s3 + $0x78] sm:$0xff] %v113
  // Predicated region
  $region14: #{segmentation_forward.17} parent=0 // pred_check
    _
  $region15: #{segmentation_forward.17} parent=0 // pred_check_branch
    %132 = sbr.rel (0) target = $region17
  $region16: #{segmentation_forward.17} parent=0 // pred_region
    _
  $region17: #{segmentation_forward.17} parent=0 // pred_fallthru
    _
  // Predicated region
  $region18: #{segmentation_forward.17} parent=0 // pred_check
    _
  $region19: #{segmentation_forward.17} parent=0 // pred_check_branch
    %134 = sbr.rel (0) target = $region21
  $region20: #{segmentation_forward.17} parent=0 // pred_region
    _
  $region21: #{segmentation_forward.17} parent=0 // pred_fallthru
    _

// kernel: segmentation_forward.18
$region0: #{segmentation_forward.18}
  #allocation0 [shape = 'u32[]', space=smem, size = 0x4, offset = 0x4, fixed_abs, tag = 'smem constant byte address 0x4 - core index']
  #allocation1 [shape = 'u32[72,128]{1,0:T(1,128)}', space=vmem, size = 0x9000, scoped, tag = 'internal scratch']
  %s0 = inlined_call_operand.vmem [shape: f32[16,8], index: 0, kind: input, shape index: {}]
  %s1 = inlined_call_operand.vmem [shape: f32[8,128], index: 1, kind: input, shape index: {}]
  %s2 = inlined_call_operand.vmem [shape: f32[1,128], index: 2, kind: input, shape index: {}]
  %s3 = inlined_call_operand.vmem [shape: f32[16,128], index: 3, kind: output, shape index: {}]
  %s4 = sld [smem:[#allocation0]]
  $region22: #{segmentation_forward.18} parent=0
    _
  %s6 = ssub.s32 1, %s4
  %s7 = scalar_select 0, %s6, %s4
  // Predicated region
  $region2: #{segmentation_forward.18} parent=0 // pred_check
    _
  $region3: #{segmentation_forward.18} parent=0 // pred_check_branch
    %9 = sbr.rel (0) target = $region5
  $region4: #{segmentation_forward.18} parent=0 // pred_region
    _
  $region5: #{segmentation_forward.18} parent=0 // pred_fallthru
    _
  // Predicated region
  $region6: #{segmentation_forward.18} parent=0 // pred_check
    _
  $region7: #{segmentation_forward.18} parent=0 // pred_check_branch
    %11 = sbr.rel (0) target = $region9
  $region8: #{segmentation_forward.18} parent=0 // pred_region
    _
  $region9: #{segmentation_forward.18} parent=0 // pred_fallthru
    _
  // Predicated region
  $region10: #{segmentation_forward.18} parent=0 // pred_check
    _
  $region11: #{segmentation_forward.18} parent=0 // pred_check_branch
    %13 = sbr.rel (0) target = $region13
  $region12: #{segmentation_forward.18} parent=0 // pred_region
    _
  $region13: #{segmentation_forward.18} parent=0 // pred_fallthru
    _
  %v14 = vld [vmem:[%s0] sm:$0xff]
  %v15 = vld [vmem:[%s0 + $0x8] sm:$0xff]
  %v16 = vld [vmem:[%s1] sm:$0xff]
  %v17 = vld [vmem:[%s2] sm:$0x1]
  %v19 = vperm.slane %v17, 0
  %vm21 = vcmask 64512
  %v23 = vsel %vm21, %v14, 0
  %v26 = vsel %vm21, %v15, 0
  %28 = vmatpush.msra.mxu0 0.0
  %29 = vmatpush.msra.mxu0 0.0
  %30 = vmatpush.msra.mxu0 0.0
  %31 = vmatpush.msra.mxu0 0.0
  %32 = vmatpush.msra.mxu0 0.0
  %33 = vmatpush.msra.mxu0 0.0
  %34 = vmatpush.msra.mxu0 0.0
  %35 = vmatpush.msra.mxu0 0.0
  %36 = vmatpush.msra.mxu0 0.0
  %37 = vmatpush.msra.mxu0 0.0
  %38 = vmatpush.msra.mxu0 0.0
  %39 = vmatpush.msra.mxu0 0.0
  %40 = vmatpush.msra.mxu0 0.0
  %41 = vmatpush.msra.mxu0 0.0
  %42 = vmatpush.msra.mxu0 0.0
  %43 = vmatpush.msra.mxu0 %v16
  %44 = vmatmul.f32.gmra.mxu0 %v23
  %v45 = vpop.f32.mrf.mxu0
  %v46 = vadd.f32 %v19, %v45
  %47 = vmatmul.f32.gmra.mxu0 %v26
  %v48 = vpop.f32.mrf.mxu0
  %v49 = vadd.f32 %v19, %v48
  %50 = vdwg.mxu0
  %51 = vst [vmem:[%s3] sm:$0xff] %v46
  %52 = vst [vmem:[%s3 + $0x8] sm:$0xff] %v49
  // Predicated region
  $region14: #{segmentation_forward.18} parent=0 // pred_check
    _
  $region15: #{segmentation_forward.18} parent=0 // pred_check_branch
    %54 = sbr.rel (0) target = $region17
  $region16: #{segmentation_forward.18} parent=0 // pred_region
    _
  $region17: #{segmentation_forward.18} parent=0 // pred_fallthru
    _
  // Predicated region
  $region18: #{segmentation_forward.18} parent=0 // pred_check
    _
  $region19: #{segmentation_forward.18} parent=0 // pred_check_branch
    %56 = sbr.rel (0) target = $region21
  $region20: #{segmentation_forward.18} parent=0 // pred_region
    _
  $region21: #{segmentation_forward.18} parent=0 // pred_fallthru
    _

// kernel: segmentation_forward.19
$region0: #{segmentation_forward.19}
  #allocation0 [shape = 'u32[]', space=smem, size = 0x4, offset = 0x4, fixed_abs, tag = 'smem constant byte address 0x4 - core index']
  #allocation1 [shape = 'u32[72,128]{1,0:T(1,128)}', space=vmem, size = 0x9000, scoped, tag = 'internal scratch']
  %s0 = inlined_call_operand.vmem [shape: f32[16,8], index: 0, kind: input, shape index: {}]
  %s1 = inlined_call_operand.vmem [shape: f32[8,256], index: 1, kind: input, shape index: {}]
  %s2 = inlined_call_operand.vmem [shape: f32[1,256], index: 2, kind: input, shape index: {}]
  %s3 = inlined_call_operand.vmem [shape: f32[16,256], index: 3, kind: output, shape index: {}]
  %s4 = sld [smem:[#allocation0]]
  $region22: #{segmentation_forward.19} parent=0
    _
  %s6 = ssub.s32 1, %s4
  %s7 = scalar_select 0, %s6, %s4
  // Predicated region
  $region2: #{segmentation_forward.19} parent=0 // pred_check
    _
  $region3: #{segmentation_forward.19} parent=0 // pred_check_branch
    %9 = sbr.rel (0) target = $region5
  $region4: #{segmentation_forward.19} parent=0 // pred_region
    _
  $region5: #{segmentation_forward.19} parent=0 // pred_fallthru
    _
  // Predicated region
  $region6: #{segmentation_forward.19} parent=0 // pred_check
    _
  $region7: #{segmentation_forward.19} parent=0 // pred_check_branch
    %11 = sbr.rel (0) target = $region9
  $region8: #{segmentation_forward.19} parent=0 // pred_region
    _
  $region9: #{segmentation_forward.19} parent=0 // pred_fallthru
    _
  // Predicated region
  $region10: #{segmentation_forward.19} parent=0 // pred_check
    _
  $region11: #{segmentation_forward.19} parent=0 // pred_check_branch
    %13 = sbr.rel (0) target = $region13
  $region12: #{segmentation_forward.19} parent=0 // pred_region
    _
  $region13: #{segmentation_forward.19} parent=0 // pred_fallthru
    _
  %v14 = vld [vmem:[%s0] sm:$0xff]
  %v15 = vld [vmem:[%s0 + $0x8] sm:$0xff]
  %v16 = vld [vmem:[%s1] sm:$0xff]
  %v17 = vld [vmem:[%s1 + $0x8] sm:$0xff]
  %v18 = vld [vmem:[%s2] sm:$0x3]
  %v20 = vperm.slane %v18, 0
  %v21 = vperm.slane %v18, 1
  %vm24 = vcmask 64512
  %v26 = vsel %vm24, %v14, 0
  %v29 = vsel %vm24, %v15, 0
  %31 = vmatpush.msra.mxu0 0.0
  %32 = vmatpush.msra.mxu0 0.0
  %33 = vmatpush.msra.mxu0 0.0
  %34 = vmatpush.msra.mxu0 0.0
  %35 = vmatpush.msra.mxu0 0.0
  %36 = vmatpush.msra.mxu0 0.0
  %37 = vmatpush.msra.mxu0 0.0
  %38 = vmatpush.msra.mxu0 0.0
  %39 = vmatpush.msra.mxu0 0.0
  %40 = vmatpush.msra.mxu0 0.0
  %41 = vmatpush.msra.mxu0 0.0
  %42 = vmatpush.msra.mxu0 0.0
  %43 = vmatpush.msra.mxu0 0.0
  %44 = vmatpush.msra.mxu0 0.0
  %45 = vmatpush.msra.mxu0 0.0
  %46 = vmatpush.msra.mxu0 %v16
  %47 = vmatmul.f32.gmra.mxu0 %v26
  %v48 = vpop.f32.mrf.mxu0
  %v49 = vadd.f32 %v20, %v48
  %50 = vmatmul.f32.gmra.mxu0 %v29
  %v51 = vpop.f32.mrf.mxu0
  %v52 = vadd.f32 %v20, %v51
  %53 = vdwg.mxu0
  %54 = vmatpush.msra.mxu0 0.0
  %55 = vmatpush.msra.mxu0 0.0
  %56 = vmatpush.msra.mxu0 0.0
  %57 = vmatpush.msra.mxu0 0.0
  %58 = vmatpush.msra.mxu0 0.0
  %59 = vmatpush.msra.mxu0 0.0
  %60 = vmatpush.msra.mxu0 0.0
  %61 = vmatpush.msra.mxu0 0.0
  %62 = vmatpush.msra.mxu0 0.0
  %63 = vmatpush.msra.mxu0 0.0
  %64 = vmatpush.msra.mxu0 0.0
  %65 = vmatpush.msra.mxu0 0.0
  %66 = vmatpush.msra.mxu0 0.0
  %67 = vmatpush.msra.mxu0 0.0
  %68 = vmatpush.msra.mxu0 0.0
  %69 = vmatpush.msra.mxu0 %v17
  %70 = vmatmul.f32.gmra.mxu0 %v26
  %v71 = vpop.f32.mrf.mxu0
  %v72 = vadd.f32 %v21, %v71
  %73 = vmatmul.f32.gmra.mxu0 %v29
  %v74 = vpop.f32.mrf.mxu0
  %v75 = vadd.f32 %v21, %v74
  %76 = vdwg.mxu0
  %77 = vst [vmem:[%s3] sm:$0xff] %v49
  %78 = vst [vmem:[%s3 + $0x8] sm:$0xff] %v72
  %79 = vst [vmem:[%s3 + $0x10] sm:$0xff] %v52
  %80 = vst [vmem:[%s3 + $0x18] sm:$0xff] %v75
  // Predicated region
  $region14: #{segmentation_forward.19} parent=0 // pred_check
    _
  $region15: #{segmentation_forward.19} parent=0 // pred_check_branch
    %82 = sbr.rel (0) target = $region17
  $region16: #{segmentation_forward.19} parent=0 // pred_region
    _
  $region17: #{segmentation_forward.19} parent=0 // pred_fallthru
    _
  // Predicated region
  $region18: #{segmentation_forward.19} parent=0 // pred_check
    _
  $region19: #{segmentation_forward.19} parent=0 // pred_check_branch
    %84 = sbr.rel (0) target = $region21
  $region20: #{segmentation_forward.19} parent=0 // pred_region
    _
  $region21: #{segmentation_forward.19} parent=0 // pred_fallthru
    _

// kernel: segmentation_forward.13
$region0: #{segmentation_forward.13}
  #allocation0 [shape = 'u32[]', space=smem, size = 0x4, offset = 0x4, fixed_abs, tag = 'smem constant byte address 0x4 - core index']
  #allocation1 [shape = 'u32[72,128]{1,0:T(1,128)}', space=vmem, size = 0x9000, scoped, tag = 'internal scratch']
  %s0 = inlined_call_operand.vmem [shape: f32[32,128], index: 0, kind: input, shape index: {}]
  %s1 = inlined_call_operand.vmem [shape: f32[128,128], index: 1, kind: input, shape index: {}]
  %s2 = inlined_call_operand.vmem [shape: f32[1,128], index: 2, kind: input, shape index: {}]
  %s3 = inlined_call_operand.vmem [shape: f32[32,128], index: 3, kind: output, shape index: {}]
  %s4 = sld [smem:[#allocation0]]
  $region22: #{segmentation_forward.13} parent=0
    _
  %s6 = ssub.s32 1, %s4
  %s7 = scalar_select 0, %s6, %s4
  // Predicated region
  $region2: #{segmentation_forward.13} parent=0 // pred_check
    _
  $region3: #{segmentation_forward.13} parent=0 // pred_check_branch
    %9 = sbr.rel (0) target = $region5
  $region4: #{segmentation_forward.13} parent=0 // pred_region
    _
  $region5: #{segmentation_forward.13} parent=0 // pred_fallthru
    _
  // Predicated region
  $region6: #{segmentation_forward.13} parent=0 // pred_check
    _
  $region7: #{segmentation_forward.13} parent=0 // pred_check_branch
    %11 = sbr.rel (0) target = $region9
  $region8: #{segmentation_forward.13} parent=0 // pred_region
    _
  $region9: #{segmentation_forward.13} parent=0 // pred_fallthru
    _
  // Predicated region
  $region10: #{segmentation_forward.13} parent=0 // pred_check
    _
  $region11: #{segmentation_forward.13} parent=0 // pred_check_branch
    %13 = sbr.rel (0) target = $region13
  $region12: #{segmentation_forward.13} parent=0 // pred_region
    _
  $region13: #{segmentation_forward.13} parent=0 // pred_fallthru
    _
  %v14 = vld [vmem:[%s0] sm:$0xff]
  %v15 = vld [vmem:[%s0 + $0x8] sm:$0xff]
  %v16 = vld [vmem:[%s0 + $0x10] sm:$0xff]
  %v17 = vld [vmem:[%s0 + $0x18] sm:$0xff]
  %v18 = vld [vmem:[%s1] sm:$0xff]
  %v19 = vld [vmem:[%s1 + $0x8] sm:$0xff]
  %v20 = vld [vmem:[%s1 + $0x10] sm:$0xff]
  %v21 = vld [vmem:[%s1 + $0x18] sm:$0xff]
  %v22 = vld [vmem:[%s1 + $0x20] sm:$0xff]
  %v23 = vld [vmem:[%s1 + $0x28] sm:$0xff]
  %v24 = vld [vmem:[%s1 + $0x30] sm:$0xff]
  %v25 = vld [vmem:[%s1 + $0x38] sm:$0xff]
  %v26 = vld [vmem:[%s1 + $0x40] sm:$0xff]
  %v27 = vld [vmem:[%s1 + $0x48] sm:$0xff]
  %v28 = vld [vmem:[%s1 + $0x50] sm:$0xff]
  %v29 = vld [vmem:[%s1 + $0x58] sm:$0xff]
  %v30 = vld [vmem:[%s1 + $0x60] sm:$0xff]
  %v31 = vld [vmem:[%s1 + $0x68] sm:$0xff]
  %v32 = vld [vmem:[%s1 + $0x70] sm:$0xff]
  %v33 = vld [vmem:[%s1 + $0x78] sm:$0xff]
  %v34 = vld [vmem:[%s2] sm:$0x1]
  %v36 = vperm.slane %v34, 0
  %38 = vmatpush.msra.mxu0 %v33
  %39 = vmatpush.msra.mxu0 %v32
  %40 = vmatpush.msra.mxu0 %v31
  %41 = vmatpush.msra.mxu0 %v30
  %42 = vmatpush.msra.mxu0 %v29
  %43 = vmatpush.msra.mxu0 %v28
  %44 = vmatpush.msra.mxu0 %v27
  %45 = vmatpush.msra.mxu0 %v26
  %46 = vmatpush.msra.mxu0 %v25
  %47 = vmatpush.msra.mxu0 %v24
  %48 = vmatpush.msra.mxu0 %v23
  %49 = vmatpush.msra.mxu0 %v22
  %50 = vmatpush.msra.mxu0 %v21
  %51 = vmatpush.msra.mxu0 %v20
  %52 = vmatpush.msra.mxu0 %v19
  %53 = vmatpush.msra.mxu0 %v18
  %54 = vmatmul.f32.gmra.mxu0 %v14
  %v55 = vpop.f32.mrf.mxu0
  %v56 = vadd.f32 %v36, %v55
  %57 = vmatmul.f32.gmra.mxu0 %v15
  %v58 = vpop.f32.mrf.mxu0
  %v59 = vadd.f32 %v36, %v58
  %60 = vmatmul.f32.gmra.mxu0 %v16
  %v61 = vpop.f32.mrf.mxu0
  %v62 = vadd.f32 %v36, %v61
  %63 = vmatmul.f32.gmra.mxu0 %v17
  %v64 = vpop.f32.mrf.mxu0
  %v65 = vadd.f32 %v36, %v64
  %66 = vdwg.mxu0
  %67 = vst [vmem:[%s3] sm:$0xff] %v56
  %68 = vst [vmem:[%s3 + $0x8] sm:$0xff] %v59
  %69 = vst [vmem:[%s3 + $0x10] sm:$0xff] %v62
  %70 = vst [vmem:[%s3 + $0x18] sm:$0xff] %v65
  // Predicated region
  $region14: #{segmentation_forward.13} parent=0 // pred_check
    _
  $region15: #{segmentation_forward.13} parent=0 // pred_check_branch
    %72 = sbr.rel (0) target = $region17
  $region16: #{segmentation_forward.13} parent=0 // pred_region
    _
  $region17: #{segmentation_forward.13} parent=0 // pred_fallthru
    _
  // Predicated region
  $region18: #{segmentation_forward.13} parent=0 // pred_check
    _
  $region19: #{segmentation_forward.13} parent=0 // pred_check_branch
    %74 = sbr.rel (0) target = $region21
  $region20: #{segmentation_forward.13} parent=0 // pred_region
    _
  $region21: #{segmentation_forward.13} parent=0 // pred_fallthru
    _

// kernel: segmentation_forward.11
$region0: #{segmentation_forward.11}
  #allocation0 [shape = 'u32[]', space=smem, size = 0x4, offset = 0x4, fixed_abs, tag = 'smem constant byte address 0x4 - core index']
  #allocation1 [shape = 'u32[72,128]{1,0:T(1,128)}', space=vmem, size = 0x9000, scoped, tag = 'internal scratch']
  %s0 = inlined_call_operand.vmem [shape: f32[32,384], index: 0, kind: input, shape index: {}]
  %s1 = inlined_call_operand.vmem [shape: f32[384,128], index: 1, kind: input, shape index: {}]
  %s2 = inlined_call_operand.vmem [shape: f32[1,128], index: 2, kind: input, shape index: {}]
  %s3 = inlined_call_operand.vmem [shape: f32[32,128], index: 3, kind: output, shape index: {}]
  %s4 = sld [smem:[#allocation0]]
  $region22: #{segmentation_forward.11} parent=0
    _
  %s6 = ssub.s32 1, %s4
  %s7 = scalar_select 0, %s6, %s4
  // Predicated region
  $region2: #{segmentation_forward.11} parent=0 // pred_check
    _
  $region3: #{segmentation_forward.11} parent=0 // pred_check_branch
    %9 = sbr.rel (0) target = $region5
  $region4: #{segmentation_forward.11} parent=0 // pred_region
    _
  $region5: #{segmentation_forward.11} parent=0 // pred_fallthru
    _
  // Predicated region
  $region6: #{segmentation_forward.11} parent=0 // pred_check
    _
  $region7: #{segmentation_forward.11} parent=0 // pred_check_branch
    %11 = sbr.rel (0) target = $region9
  $region8: #{segmentation_forward.11} parent=0 // pred_region
    _
  $region9: #{segmentation_forward.11} parent=0 // pred_fallthru
    _
  // Predicated region
  $region10: #{segmentation_forward.11} parent=0 // pred_check
    _
  $region11: #{segmentation_forward.11} parent=0 // pred_check_branch
    %13 = sbr.rel (0) target = $region13
  $region12: #{segmentation_forward.11} parent=0 // pred_region
    _
  $region13: #{segmentation_forward.11} parent=0 // pred_fallthru
    _
  %v14 = vld [vmem:[%s0] sm:$0xff]
  %v15 = vld [vmem:[%s0 + $0x8] sm:$0xff]
  %v16 = vld [vmem:[%s0 + $0x10] sm:$0xff]
  %v17 = vld [vmem:[%s0 + $0x18] sm:$0xff]
  %v18 = vld [vmem:[%s0 + $0x20] sm:$0xff]
  %v19 = vld [vmem:[%s0 + $0x28] sm:$0xff]
  %v20 = vld [vmem:[%s0 + $0x30] sm:$0xff]
  %v21 = vld [vmem:[%s0 + $0x38] sm:$0xff]
  %v22 = vld [vmem:[%s0 + $0x40] sm:$0xff]
  %v23 = vld [vmem:[%s0 + $0x48] sm:$0xff]
  %v24 = vld [vmem:[%s0 + $0x50] sm:$0xff]
  %v25 = vld [vmem:[%s0 + $0x58] sm:$0xff]
  %v26 = vld [vmem:[%s1] sm:$0xff]
  %v27 = vld [vmem:[%s1 + $0x8] sm:$0xff]
  %v28 = vld [vmem:[%s1 + $0x10] sm:$0xff]
  %v29 = vld [vmem:[%s1 + $0x18] sm:$0xff]
  %v30 = vld [vmem:[%s1 + $0x20] sm:$0xff]
  %v31 = vld [vmem:[%s1 + $0x28] sm:$0xff]
  %v32 = vld [vmem:[%s1 + $0x30] sm:$0xff]
  %v33 = vld [vmem:[%s1 + $0x38] sm:$0xff]
  %v34 = vld [vmem:[%s1 + $0x40] sm:$0xff]
  %v35 = vld [vmem:[%s1 + $0x48] sm:$0xff]
  %v36 = vld [vmem:[%s1 + $0x50] sm:$0xff]
  %v37 = vld [vmem:[%s1 + $0x58] sm:$0xff]
  %v38 = vld [vmem:[%s1 + $0x60] sm:$0xff]
  %v39 = vld [vmem:[%s1 + $0x68] sm:$0xff]
  %v40 = vld [vmem:[%s1 + $0x70] sm:$0xff]
  %v41 = vld [vmem:[%s1 + $0x78] sm:$0xff]
  %v42 = vld [vmem:[%s1 + $0x80] sm:$0xff]
  %v43 = vld [vmem:[%s1 + $0x88] sm:$0xff]
  %v44 = vld [vmem:[%s1 + $0x90] sm:$0xff]
  %v45 = vld [vmem:[%s1 + $0x98] sm:$0xff]
  %v46 = vld [vmem:[%s1 + $0xa0] sm:$0xff]
  %v47 = vld [vmem:[%s1 + $0xa8] sm:$0xff]
  %v48 = vld [vmem:[%s1 + $0xb0] sm:$0xff]
  %v49 = vld [vmem:[%s1 + $0xb8] sm:$0xff]
  %v50 = vld [vmem:[%s1 + $0xc0] sm:$0xff]
  %v51 = vld [vmem:[%s1 + $0xc8] sm:$0xff]
  %v52 = vld [vmem:[%s1 + $0xd0] sm:$0xff]
  %v53 = vld [vmem:[%s1 + $0xd8] sm:$0xff]
  %v54 = vld [vmem:[%s1 + $0xe0] sm:$0xff]
  %v55 = vld [vmem:[%s1 + $0xe8] sm:$0xff]
  %v56 = vld [vmem:[%s1 + $0xf0] sm:$0xff]
  %v57 = vld [vmem:[%s1 + $0xf8] sm:$0xff]
  %v58 = vld [vmem:[%s1 + $0x100] sm:$0xff]
  %v59 = vld [vmem:[%s1 + $0x108] sm:$0xff]
  %v60 = vld [vmem:[%s1 + $0x110] sm:$0xff]
  %v61 = vld [vmem:[%s1 + $0x118] sm:$0xff]
  %v62 = vld [vmem:[%s1 + $0x120] sm:$0xff]
  %v63 = vld [vmem:[%s1 + $0x128] sm:$0xff]
  %v64 = vld [vmem:[%s1 + $0x130] sm:$0xff]
  %v65 = vld [vmem:[%s1 + $0x138] sm:$0xff]
  %v66 = vld [vmem:[%s1 + $0x140] sm:$0xff]
  %v67 = vld [vmem:[%s1 + $0x148] sm:$0xff]
  %v68 = vld [vmem:[%s1 + $0x150] sm:$0xff]
  %v69 = vld [vmem:[%s1 + $0x158] sm:$0xff]
  %v70 = vld [vmem:[%s1 + $0x160] sm:$0xff]
  %v71 = vld [vmem:[%s1 + $0x168] sm:$0xff]
  %v72 = vld [vmem:[%s1 + $0x170] sm:$0xff]
  %v73 = vld [vmem:[%s1 + $0x178] sm:$0xff]
  %v74 = vld [vmem:[%s2] sm:$0x1]
  %v76 = vperm.slane %v74, 0
  %78 = vmatpush.msra.mxu0 %v41
  %79 = vmatpush.msra.mxu0 %v40
  %80 = vmatpush.msra.mxu0 %v39
  %81 = vmatpush.msra.mxu0 %v38
  %82 = vmatpush.msra.mxu0 %v37
  %83 = vmatpush.msra.mxu0 %v36
  %84 = vmatpush.msra.mxu0 %v35
  %85 = vmatpush.msra.mxu0 %v34
  %86 = vmatpush.msra.mxu0 %v33
  %87 = vmatpush.msra.mxu0 %v32
  %88 = vmatpush.msra.mxu0 %v31
  %89 = vmatpush.msra.mxu0 %v30
  %90 = vmatpush.msra.mxu0 %v29
  %91 = vmatpush.msra.mxu0 %v28
  %92 = vmatpush.msra.mxu0 %v27
  %93 = vmatpush.msra.mxu0 %v26
  %94 = vmatmul.f32.gmra.mxu0 %v14
  %v95 = vpop.f32.mrf.mxu0
  %v96 = vadd.f32 %v76, %v95
  %97 = vmatmul.f32.gmra.mxu0 %v17
  %v98 = vpop.f32.mrf.mxu0
  %v99 = vadd.f32 %v76, %v98
  %100 = vmatmul.f32.gmra.mxu0 %v20
  %v101 = vpop.f32.mrf.mxu0
  %v102 = vadd.f32 %v76, %v101
  %103 = vmatmul.f32.gmra.mxu0 %v23
  %v104 = vpop.f32.mrf.mxu0
  %v105 = vadd.f32 %v76, %v104
  %106 = vdwg.mxu0
  %107 = vmatpush.msra.mxu0 %v57
  %108 = vmatpush.msra.mxu0 %v56
  %109 = vmatpush.msra.mxu0 %v55
  %110 = vmatpush.msra.mxu0 %v54
  %111 = vmatpush.msra.mxu0 %v53
  %112 = vmatpush.msra.mxu0 %v52
  %113 = vmatpush.msra.mxu0 %v51
  %114 = vmatpush.msra.mxu0 %v50
  %115 = vmatpush.msra.mxu0 %v49
  %116 = vmatpush.msra.mxu0 %v48
  %117 = vmatpush.msra.mxu0 %v47
  %118 = vmatpush.msra.mxu0 %v46
  %119 = vmatpush.msra.mxu0 %v45
  %120 = vmatpush.msra.mxu0 %v44
  %121 = vmatpush.msra.mxu0 %v43
  %122 = vmatpush.msra.mxu0 %v42
  %123 = vmatmul.f32.gmra.mxu0 %v15
  %v124 = vpop.f32.mrf.mxu0
  %v125 = vadd.f32 %v96, %v124
  %126 = vmatmul.f32.gmra.mxu0 %v18
  %v127 = vpop.f32.mrf.mxu0
  %v128 = vadd.f32 %v99, %v127
  %129 = vmatmul.f32.gmra.mxu0 %v21
  %v130 = vpop.f32.mrf.mxu0
  %v131 = vadd.f32 %v102, %v130
  %132 = vmatmul.f32.gmra.mxu0 %v24
  %v133 = vpop.f32.mrf.mxu0
  %v134 = vadd.f32 %v105, %v133
  %135 = vdwg.mxu0
  %136 = vmatpush.msra.mxu0 %v73
  %137 = vmatpush.msra.mxu0 %v72
  %138 = vmatpush.msra.mxu0 %v71
  %139 = vmatpush.msra.mxu0 %v70
  %140 = vmatpush.msra.mxu0 %v69
  %141 = vmatpush.msra.mxu0 %v68
  %142 = vmatpush.msra.mxu0 %v67
  %143 = vmatpush.msra.mxu0 %v66
  %144 = vmatpush.msra.mxu0 %v65
  %145 = vmatpush.msra.mxu0 %v64
  %146 = vmatpush.msra.mxu0 %v63
  %147 = vmatpush.msra.mxu0 %v62
  %148 = vmatpush.msra.mxu0 %v61
  %149 = vmatpush.msra.mxu0 %v60
  %150 = vmatpush.msra.mxu0 %v59
  %151 = vmatpush.msra.mxu0 %v58
  %152 = vmatmul.f32.gmra.mxu0 %v16
  %v153 = vpop.f32.mrf.mxu0
  %v154 = vadd.f32 %v125, %v153
  %155 = vmatmul.f32.gmra.mxu0 %v19
  %v156 = vpop.f32.mrf.mxu0
  %v157 = vadd.f32 %v128, %v156
  %158 = vmatmul.f32.gmra.mxu0 %v22
  %v159 = vpop.f32.mrf.mxu0
  %v160 = vadd.f32 %v131, %v159
  %161 = vmatmul.f32.gmra.mxu0 %v25
  %v162 = vpop.f32.mrf.mxu0
  %v163 = vadd.f32 %v134, %v162
  %164 = vdwg.mxu0
  %v165 = vmax.f32 %v154, 0.0
  %v166 = vmax.f32 %v157, 0.0
  %v167 = vmax.f32 %v160, 0.0
  %v168 = vmax.f32 %v163, 0.0
  %169 = vst [vmem:[%s3] sm:$0xff] %v165
  %170 = vst [vmem:[%s3 + $0x8] sm:$0xff] %v166
  %171 = vst [vmem:[%s3 + $0x10] sm:$0xff] %v167
  %172 = vst [vmem:[%s3 + $0x18] sm:$0xff] %v168
  // Predicated region
  $region14: #{segmentation_forward.11} parent=0 // pred_check
    _
  $region15: #{segmentation_forward.11} parent=0 // pred_check_branch
    %174 = sbr.rel (0) target = $region17
  $region16: #{segmentation_forward.11} parent=0 // pred_region
    _
  $region17: #{segmentation_forward.11} parent=0 // pred_fallthru
    _
  // Predicated region
  $region18: #{segmentation_forward.11} parent=0 // pred_check
    _
  $region19: #{segmentation_forward.11} parent=0 // pred_check_branch
    %176 = sbr.rel (0) target = $region21
  $region20: #{segmentation_forward.11} parent=0 // pred_region
    _
  $region21: #{segmentation_forward.11} parent=0 // pred_fallthru
    _

// kernel: segmentation_forward.14
$region0: #{segmentation_forward.14}
  #allocation0 [shape = 'u32[]', space=smem, size = 0x4, offset = 0x4, fixed_abs, tag = 'smem constant byte address 0x4 - core index']
  #allocation1 [shape = 'u32[72,128]{1,0:T(1,128)}', space=vmem, size = 0x9000, scoped, tag = 'internal scratch']
  %s0 = inlined_call_operand.vmem [shape: f32[16,4], index: 0, kind: input, shape index: {}]
  %s1 = inlined_call_operand.vmem [shape: f32[4,128], index: 1, kind: input, shape index: {}]
  %s2 = inlined_call_operand.vmem [shape: f32[1,128], index: 2, kind: input, shape index: {}]
  %s3 = inlined_call_operand.vmem [shape: f32[16,128], index: 3, kind: output, shape index: {}]
  %s4 = sld [smem:[#allocation0]]
  $region22: #{segmentation_forward.14} parent=0
    _
  %s6 = ssub.s32 1, %s4
  %s7 = scalar_select 0, %s6, %s4
  // Predicated region
  $region2: #{segmentation_forward.14} parent=0 // pred_check
    _
  $region3: #{segmentation_forward.14} parent=0 // pred_check_branch
    %9 = sbr.rel (0) target = $region5
  $region4: #{segmentation_forward.14} parent=0 // pred_region
    _
  $region5: #{segmentation_forward.14} parent=0 // pred_fallthru
    _
  // Predicated region
  $region6: #{segmentation_forward.14} parent=0 // pred_check
    _
  $region7: #{segmentation_forward.14} parent=0 // pred_check_branch
    %11 = sbr.rel (0) target = $region9
  $region8: #{segmentation_forward.14} parent=0 // pred_region
    _
  $region9: #{segmentation_forward.14} parent=0 // pred_fallthru
    _
  // Predicated region
  $region10: #{segmentation_forward.14} parent=0 // pred_check
    _
  $region11: #{segmentation_forward.14} parent=0 // pred_check_branch
    %13 = sbr.rel (0) target = $region13
  $region12: #{segmentation_forward.14} parent=0 // pred_region
    _
  $region13: #{segmentation_forward.14} parent=0 // pred_fallthru
    _
  %v14 = vld [vmem:[%s0] sm:$0xff]
  %v15 = vld [vmem:[%s0 + $0x8] sm:$0xff]
  %v16 = vld [vmem:[%s1] sm:$0xf]
  %v17 = vld [vmem:[%s2] sm:$0x1]
  %v19 = vperm.slane %v17, 0
  %vm21 = vcmask 31744
  %v23 = vsel %vm21, %v14, 0
  %v26 = vsel %vm21, %v15, 0
  %vm28 = vcmask 1043456
  %v30 = vsel %vm28, %v16, 0
  %32 = vmatpush.msra.mxu0 0.0
  %33 = vmatpush.msra.mxu0 0.0
  %34 = vmatpush.msra.mxu0 0.0
  %35 = vmatpush.msra.mxu0 0.0
  %36 = vmatpush.msra.mxu0 0.0
  %37 = vmatpush.msra.mxu0 0.0
  %38 = vmatpush.msra.mxu0 0.0
  %39 = vmatpush.msra.mxu0 0.0
  %40 = vmatpush.msra.mxu0 0.0
  %41 = vmatpush.msra.mxu0 0.0
  %42 = vmatpush.msra.mxu0 0.0
  %43 = vmatpush.msra.mxu0 0.0
  %44 = vmatpush.msra.mxu0 0.0
  %45 = vmatpush.msra.mxu0 0.0
  %46 = vmatpush.msra.mxu0 0.0
  %47 = vmatpush.msra.mxu0 %v30
  %48 = vmatmul.f32.gmra.mxu0 %v23
  %v49 = vpop.f32.mrf.mxu0
  %v50 = vadd.f32 %v19, %v49
  %51 = vmatmul.f32.gmra.mxu0 %v26
  %v52 = vpop.f32.mrf.mxu0
  %v53 = vadd.f32 %v19, %v52
  %54 = vdwg.mxu0
  %55 = vst [vmem:[%s3] sm:$0xff] %v50
  %56 = vst [vmem:[%s3 + $0x8] sm:$0xff] %v53
  // Predicated region
  $region14: #{segmentation_forward.14} parent=0 // pred_check
    _
  $region15: #{segmentation_forward.14} parent=0 // pred_check_branch
    %58 = sbr.rel (0) target = $region17
  $region16: #{segmentation_forward.14} parent=0 // pred_region
    _
  $region17: #{segmentation_forward.14} parent=0 // pred_fallthru
    _
  // Predicated region
  $region18: #{segmentation_forward.14} parent=0 // pred_check
    _
  $region19: #{segmentation_forward.14} parent=0 // pred_check_branch
    %60 = sbr.rel (0) target = $region21
  $region20: #{segmentation_forward.14} parent=0 // pred_region
    _
  $region21: #{segmentation_forward.14} parent=0 // pred_fallthru
    _

// kernel: segmentation_forward.15
$region0: #{segmentation_forward.15}
  #allocation0 [shape = 'u32[]', space=smem, size = 0x4, offset = 0x4, fixed_abs, tag = 'smem constant byte address 0x4 - core index']
  #allocation1 [shape = 'u32[72,128]{1,0:T(1,128)}', space=vmem, size = 0x9000, scoped, tag = 'internal scratch']
  %s0 = inlined_call_operand.vmem [shape: f32[16,4], index: 0, kind: input, shape index: {}]
  %s1 = inlined_call_operand.vmem [shape: f32[4,256], index: 1, kind: input, shape index: {}]
  %s2 = inlined_call_operand.vmem [shape: f32[1,256], index: 2, kind: input, shape index: {}]
  %s3 = inlined_call_operand.vmem [shape: f32[16,256], index: 3, kind: output, shape index: {}]
  %s4 = sld [smem:[#allocation0]]
  $region22: #{segmentation_forward.15} parent=0
    _
  %s6 = ssub.s32 1, %s4
  %s7 = scalar_select 0, %s6, %s4
  // Predicated region
  $region2: #{segmentation_forward.15} parent=0 // pred_check
    _
  $region3: #{segmentation_forward.15} parent=0 // pred_check_branch
    %9 = sbr.rel (0) target = $region5
  $region4: #{segmentation_forward.15} parent=0 // pred_region
    _
  $region5: #{segmentation_forward.15} parent=0 // pred_fallthru
    _
  // Predicated region
  $region6: #{segmentation_forward.15} parent=0 // pred_check
    _
  $region7: #{segmentation_forward.15} parent=0 // pred_check_branch
    %11 = sbr.rel (0) target = $region9
  $region8: #{segmentation_forward.15} parent=0 // pred_region
    _
  $region9: #{segmentation_forward.15} parent=0 // pred_fallthru
    _
  // Predicated region
  $region10: #{segmentation_forward.15} parent=0 // pred_check
    _
  $region11: #{segmentation_forward.15} parent=0 // pred_check_branch
    %13 = sbr.rel (0) target = $region13
  $region12: #{segmentation_forward.15} parent=0 // pred_region
    _
  $region13: #{segmentation_forward.15} parent=0 // pred_fallthru
    _
  %v14 = vld [vmem:[%s0] sm:$0xff]
  %v15 = vld [vmem:[%s0 + $0x8] sm:$0xff]
  %v16 = vld [vmem:[%s1] sm:$0xff]
  %v17 = vld [vmem:[%s2] sm:$0x3]
  %v19 = vperm.slane %v17, 0
  %v20 = vperm.slane %v17, 1
  %24 = vst [vmem:[#allocation1] ss:$2 sm:$0xff] %v16
  %v25 = vld.sshfl [vmem:[#allocation1] sm:$0xff pattern:$0x75316420]
  %v26 = vld.sshfl [vmem:[#allocation1 + $0x8] sm:$0xff pattern:$0x75316420]
  %vm27 = vcmask 31744
  %v29 = vsel %vm27, %v14, 0
  %v32 = vsel %vm27, %v15, 0
  %vm34 = vcmask 1043456
  %v35 = vsel %vm34, %v25, 0
  %v37 = vsel %vm34, %v26, 0
  %39 = vmatpush.msra.mxu0 0.0
  %40 = vmatpush.msra.mxu0 0.0
  %41 = vmatpush.msra.mxu0 0.0
  %42 = vmatpush.msra.mxu0 0.0
  %43 = vmatpush.msra.mxu0 0.0
  %44 = vmatpush.msra.mxu0 0.0
  %45 = vmatpush.msra.mxu0 0.0
  %46 = vmatpush.msra.mxu0 0.0
  %47 = vmatpush.msra.mxu0 0.0
  %48 = vmatpush.msra.mxu0 0.0
  %49 = vmatpush.msra.mxu0 0.0
  %50 = vmatpush.msra.mxu0 0.0
  %51 = vmatpush.msra.mxu0 0.0
  %52 = vmatpush.msra.mxu0 0.0
  %53 = vmatpush.msra.mxu0 0.0
  %54 = vmatpush.msra.mxu0 %v35
  %55 = vmatmul.f32.gmra.mxu0 %v29
  %v56 = vpop.f32.mrf.mxu0
  %v57 = vadd.f32 %v19, %v56
  %58 = vmatmul.f32.gmra.mxu0 %v32
  %v59 = vpop.f32.mrf.mxu0
  %v60 = vadd.f32 %v19, %v59
  %61 = vdwg.mxu0
  %62 = vmatpush.msra.mxu0 0.0
  %63 = vmatpush.msra.mxu0 0.0
  %64 = vmatpush.msra.mxu0 0.0
  %65 = vmatpush.msra.mxu0 0.0
  %66 = vmatpush.msra.mxu0 0.0
  %67 = vmatpush.msra.mxu0 0.0
  %68 = vmatpush.msra.mxu0 0.0
  %69 = vmatpush.msra.mxu0 0.0
  %70 = vmatpush.msra.mxu0 0.0
  %71 = vmatpush.msra.mxu0 0.0
  %72 = vmatpush.msra.mxu0 0.0
  %73 = vmatpush.msra.mxu0 0.0
  %74 = vmatpush.msra.mxu0 0.0
  %75 = vmatpush.msra.mxu0 0.0
  %76 = vmatpush.msra.mxu0 0.0
  %77 = vmatpush.msra.mxu0 %v37
  %78 = vmatmul.f32.gmra.mxu0 %v29
  %v79 = vpop.f32.mrf.mxu0
  %v80 = vadd.f32 %v20, %v79
  %81 = vmatmul.f32.gmra.mxu0 %v32
  %v82 = vpop.f32.mrf.mxu0
  %v83 = vadd.f32 %v20, %v82
  %84 = vdwg.mxu0
  %85 = vst [vmem:[%s3] sm:$0xff] %v57
  %86 = vst [vmem:[%s3 + $0x8] sm:$0xff] %v80
  %87 = vst [vmem:[%s3 + $0x10] sm:$0xff] %v60
  %88 = vst [vmem:[%s3 + $0x18] sm:$0xff] %v83
  // Predicated region
  $region14: #{segmentation_forward.15} parent=0 // pred_check
    _
  $region15: #{segmentation_forward.15} parent=0 // pred_check_branch
    %90 = sbr.rel (0) target = $region17
  $region16: #{segmentation_forward.15} parent=0 // pred_region
    _
  $region17: #{segmentation_forward.15} parent=0 // pred_fallthru
    _
  // Predicated region
  $region18: #{segmentation_forward.15} parent=0 // pred_check
    _
  $region19: #{segmentation_forward.15} parent=0 // pred_check_branch
    %92 = sbr.rel (0) target = $region21
  $region20: #{segmentation_forward.15} parent=0 // pred_region
    _
  $region21: #{segmentation_forward.15} parent=0 // pred_fallthru
    _

</llo_original>
